<compile_context>
chip_gen: v6e
topology: v6e:2x2x1
jax: 0.10.0
libtpu: 0.0.40
codegen_flags: <defaults>
</compile_context>

<pallas_src>
import functools

import jax
import jax.numpy as jnp
from jax.experimental import pallas as pl
from jax.experimental.pallas import tpu as pltpu


# ----------------------------------------------------------------------------
# Tile selection
# ----------------------------------------------------------------------------
def _num_tensorcores():
    """Best-effort TensorCores per chip (v7x = 2, v5e/v6e = 1)."""
    try:
        kind = (getattr(jax.devices()[0], "device_kind", "") or "").lower()
        if "v7" in kind:
            return 2
    except Exception:
        pass
    return 1


def _round_up(x, m):
    return (x + m - 1) // m * m


def _choose_tile(n, n_cores):
    """Lane-axis batch tile (multiple of 128)."""
    n128 = _round_up(n, 128)
    if n_cores <= 1:
        # Single TensorCore: the ~0.35us per-grid-step overhead dominates for
        # this tiny network, so minimize the step count with a big tile.
        return min(2048, n128)
    # v7x: two TensorCores share the "parallel" grid axis -> prefer an even
    # step count, exact fit (no padding) first, largest tile first.
    for t in (1024, 512, 256, 128):
        steps = n128 // t
        if n128 % t == 0 and steps >= 2 and steps % 2 == 0:
            return t
    for t in (1024, 512, 256, 128):
        steps = -(-n128 // t)
        if steps >= 2 and steps % 2 == 0:
            return t
    return min(2048, n128)


# ----------------------------------------------------------------------------
# Pallas kernel: full MLP forward + analytic u_t, u_x, u_xx + AC residual f
# ----------------------------------------------------------------------------
def _pinn_ac_kernel(p_ref, w0_ref, b0_ref, wh_ref, bh_ref, wl_ref, bl_ref,
                    out_ref, hs_ref, *, n_mid):
    """Batch on the lane axis.  p_ref is (2, TILE) with rows [t, x]; weights
    are (fan_out, fan_in); hidden state + tangents live in hs_ref (H, 4*TILE)
    as lane slices [h | h_t | h_x | h_xx].  Output is (5, TILE):
    rows = [u, u_t, u_x, u_xx, f]."""
    tb = p_ref.shape[1]

    def act(z):
        # sigmoid via a single EUP tanh: sigma(z) = 0.5*tanh(z/2) + 0.5
        a = 0.5 * jnp.tanh(0.5 * z) + 0.5
        s1 = a * (1.0 - a)             # sigma'
        s2 = s1 * (1.0 - 2.0 * a)      # sigma''
        return a, s1, s2

    # ---- layer 0: broadcast outer-product, tangents are columns of W0 ------
    w0 = w0_ref[...]                                   # (H, 2)
    t_row = p_ref[0:1, :]                              # (1, tb)
    x_row = p_ref[1:2, :]                              # (1, tb)
    wt = w0[:, 0:1]                                    # dz/dt  (H, 1)
    wx = w0[:, 1:2]                                    # dz/dx  (H, 1)
    z = wt * t_row + wx * x_row + b0_ref[...]          # (H, tb)
    a, s1, s2 = act(z)
    hs_ref[:, 0 * tb:1 * tb] = a
    hs_ref[:, 1 * tb:2 * tb] = s1 * wt
    hs_ref[:, 2 * tb:3 * tb] = s1 * wx
    hs_ref[:, 3 * tb:4 * tb] = s2 * (wx * wx)

    # ---- hidden layers: ONE stacked matmul for all four tangent streams ----
    for i in range(n_mid):
        zs = jnp.dot(wh_ref[i], hs_ref[...],
                     preferred_element_type=jnp.float32)          # (H, 4*tb)
        z = zs[:, 0 * tb:1 * tb] + bh_ref[i]   # bias only on the value stream
        zt = zs[:, 1 * tb:2 * tb]
        zx = zs[:, 2 * tb:3 * tb]
        zxx = zs[:, 3 * tb:4 * tb]
        a, s1, s2 = act(z)
        hs_ref[:, 0 * tb:1 * tb] = a
        hs_ref[:, 1 * tb:2 * tb] = s1 * zt
        hs_ref[:, 2 * tb:3 * tb] = s1 * zx
        hs_ref[:, 3 * tb:4 * tb] = s2 * zx * zx + s1 * zxx

    # ---- final linear layer (no activation) ---------------------------------
    zs = jnp.dot(wl_ref[...], hs_ref[...],
                 preferred_element_type=jnp.float32)               # (1, 4*tb)
    u = zs[:, 0 * tb:1 * tb] + bl_ref[...]
    ut = zs[:, 1 * tb:2 * tb]
    ux = zs[:, 2 * tb:3 * tb]
    uxx = zs[:, 3 * tb:4 * tb]

    # Allen–Cahn residual: f = u_t - 1e-4 * u_xx + 5*u^3 - 5*u
    f = ut - 1e-4 * uxx + 5.0 * u * u * u - 5.0 * u

    out_ref[0:1, :] = u
    out_ref[1:2, :] = ut
    out_ref[2:3, :] = ux
    out_ref[3:4, :] = uxx
    out_ref[4:5, :] = f


def mlp_deriv_packed(params, pts):
    """pts: (N, 2) rows [t, x].  Returns a packed (5, N) f32 array with rows
    [u, u_t, u_x, u_xx, f] (slice lazily at the consumer)."""
    w0, b0, wh, bh, wl, bl = params
    H = w0.shape[0]
    n = pts.shape[0]
    n_mid = wh.shape[0]
    if n_mid == 0:           # hidden_layers == 1: pass a dummy (never read)
        wh = jnp.zeros((1, H, H), jnp.float32)
        bh = jnp.zeros((1, H, 1), jnp.float32)

    tile = _choose_tile(n, _num_tensorcores())
    n_pad = _round_up(n, tile)
    p_t = jnp.pad(pts.astype(jnp.float32), ((0, n_pad - n), (0, 0))).T  # (2, n_pad)
    grid = (n_pad // tile,)

    n_act_layers = n_mid + 1
    param_bytes = 4 * sum(int(a.size) for a in (w0, b0, wh, bh, wl, bl))
    cost = pl.CostEstimate(
        flops=(2 * H * H * 4 * n_pad * n_mid       # hidden stacked matmuls
               + 2 * H * 4 * n_pad                 # final layer
               + 16 * H * n_pad * n_act_layers     # activation/tangent elementwise
               + 8 * H * n_pad                     # layer-0 outer product
               + 16 * n_pad),                      # AC residual
        transcendentals=H * n_pad * n_act_layers,
        bytes_accessed=(2 + 5) * n_pad * 4 + param_bytes,
    )

    packed = pl.pallas_call(
        functools.partial(_pinn_ac_kernel, n_mid=n_mid),
        out_shape=jax.ShapeDtypeStruct((5, n_pad), jnp.float32),
        grid_spec=pltpu.PrefetchScalarGridSpec(
            num_scalar_prefetch=0,
            grid=grid,
            in_specs=[
                pl.BlockSpec((2, tile), lambda i: (0, i)),
                pl.BlockSpec(w0.shape, lambda i: (0, 0)),
                pl.BlockSpec(b0.shape, lambda i: (0, 0)),
                pl.BlockSpec(wh.shape, lambda i: (0, 0, 0)),
                pl.BlockSpec(bh.shape, lambda i: (0, 0, 0)),
                pl.BlockSpec(wl.shape, lambda i: (0, 0)),
                pl.BlockSpec(bl.shape, lambda i: (0, 0)),
            ],
            out_specs=pl.BlockSpec((5, tile), lambda i: (0, i)),
            scratch_shapes=[pltpu.VMEM((H, 4 * tile), jnp.float32)],
        ),
        compiler_params=pltpu.CompilerParams(
            dimension_semantics=("parallel",)),
        cost_estimate=cost,
    )(p_t, w0, b0, wh, bh, wl, bl)

    return packed[:, :n]


# ----------------------------------------------------------------------------
# PINN_AC.forward equivalent
# ----------------------------------------------------------------------------
def pinn_ac_forward(params, p, p_bc=None, p_ic=None):
    if p_bc is None:
        packed = mlp_deriv_packed(params, p)
        return packed[0].reshape(-1, 1)                     # u only

    # Single fused launch: evaluate the network (and its tangents) on the
    # collocation and initial-condition points together; slice lazily.
    n, n_ic = p.shape[0], p_ic.shape[0]
    pts = jnp.concatenate([p.astype(jnp.float32), p_ic.astype(jnp.float32)], 0)
    packed = mlp_deriv_packed(params, pts)                  # (5, n + n_ic)
    f = packed[4, :n].reshape(n, 1)                         # AC residual on p
    iv_bar = packed[0, n:n + n_ic].reshape(n_ic, 1)         # u on p_ic

    # PyTorch reference: `p_bcop = p_bc` aliases the SAME tensor and the
    # in-place negation of column 1 hits both names, so u_b == u_bop and
    # u_b_x == u_bop_x exactly -> bv_bar and bv_x_bar are identically zero.
    # TODO(synk): if the original intended periodic BCs (u(t,-1) vs u(t,+1)),
    # replace these zeros with a real evaluation on the mirrored points.
    bv_bar = jnp.zeros((p_bc.shape[0], 1), jnp.float32)
    bv_x_bar = jnp.zeros((p_bc.shape[0],), jnp.float32)
    return f, bv_bar, bv_x_bar, iv_bar


# ----------------------------------------------------------------------------
# Deterministic parameter init (xavier_normal weights, torch-style biases),
# stored in (fan_out, fan_in) layout so the kernel computes W @ h.
# ----------------------------------------------------------------------------
def init_params(key, dim_in, dim_out, dim_hidden, hidden_layers):
    keys = jax.random.split(key, 2 * (hidden_layers + 1))

    def xavier(k, fan_out, fan_in):
        std = (2.0 / (fan_in + fan_out)) ** 0.5
        return std * jax.random.normal(k, (fan_out, fan_in), jnp.float32)

    def bias(k, fan_in, fan_out):
        bound = 1.0 / (fan_in ** 0.5)
        return jax.random.uniform(k, (fan_out, 1), jnp.float32, -bound, bound)

    w0 = xavier(keys[0], dim_hidden, dim_in)            # (H, 2)
    b0 = bias(keys[1], dim_in, dim_hidden)              # (H, 1)
    whs, bhs = [], []
    for i in range(1, hidden_layers):
        whs.append(xavier(keys[2 * i], dim_hidden, dim_hidden))
        bhs.append(bias(keys[2 * i + 1], dim_hidden, dim_hidden))
    if whs:
        wh = jnp.stack(whs)                             # (hidden_layers-1, H, H)
        bh = jnp.stack(bhs)                             # (hidden_layers-1, H, 1)
    else:
        wh = jnp.zeros((0, dim_hidden, dim_hidden), jnp.float32)
        bh = jnp.zeros((0, dim_hidden, 1), jnp.float32)
    wl = xavier(keys[-2], dim_out, dim_hidden)          # (1, H)
    bl = bias(keys[-1], dim_hidden, dim_out)            # (1, 1)
    return (w0, b0, wh, bh, wl, bl)


# Pure-JAX reference (per-point) for correctness checking.
def _mlp_ref(params, x):
    w0, b0, wh, bh, wl, bl = params
    h = jax.nn.sigmoid(w0 @ x + b0[:, 0])
    for i in range(wh.shape[0]):
        h = jax.nn.sigmoid(wh[i] @ h + bh[i, :, 0])
    return (wl @ h + bl[:, 0])[0]


if __name__ == "__main__":
    dim_in, dim_out, dim_hidden, hidden_layers = 2, 1, 32, 4
    N, N_bc, N_ic = 64, 32, 32

    key = jax.random.PRNGKey(0)
    kw, k1, k2, k3, k4 = jax.random.split(key, 5)
    params = init_params(kw, dim_in, dim_out, dim_hidden, hidden_layers)

    # collocation points p = [t, x], t in (0,1), x in (-1,1)
    p = jnp.concatenate(
        [jax.random.uniform(k1, (N, 1), jnp.float32, 0.0, 1.0),
         jax.random.uniform(k2, (N, 1), jnp.float32, -1.0, 1.0)], axis=1)
    p_bc = jnp.concatenate(
        [jax.random.uniform(k3, (N_bc, 1), jnp.float32, 0.0, 1.0),
         jnp.ones((N_bc, 1), jnp.float32)], axis=1)
    p_ic = jnp.concatenate(
        [jnp.zeros((N_ic, 1), jnp.float32),
         jax.random.uniform(k4, (N_ic, 1), jnp.float32, -1.0, 1.0)], axis=1)

    fwd = jax.jit(pinn_ac_forward)
    f, bv_bar, bv_x_bar, iv_bar = fwd(params, p, p_bc, p_ic)
    jax.block_until_ready((f, bv_bar, bv_x_bar, iv_bar))

    # u-only branch (p_bc is None)
    u_only = jax.jit(lambda pr, x: pinn_ac_forward(pr, x))(params, p)
    jax.block_until_ready(u_only)

    # --- sanity check against a pure-JAX autodiff reference ---
    u_fn = lambda x: _mlp_ref(params, x)
    g_fn = jax.grad(u_fn)
    u_r = jax.vmap(u_fn)(p)
    g_r = jax.vmap(g_fn)(p)
    uxx_r = jax.vmap(lambda x: jax.grad(lambda y: g_fn(y)[1])(x)[1])(p)
    f_r = g_r[:, 0] - 1e-4 * uxx_r + 5.0 * u_r ** 3 - 5.0 * u_r
    iv_r = jax.vmap(u_fn)(p_ic)

    assert f.shape == (N, 1) and bv_bar.shape == (N_bc, 1)
    assert bv_x_bar.shape == (N_bc,) and iv_bar.shape == (N_ic, 1)
    assert u_only.shape == (N, 1)
    assert jnp.allclose(u_only[:, 0], u_r, atol=1e-3, rtol=1e-3)
    assert jnp.allclose(f[:, 0], f_r, atol=1e-3, rtol=1e-3)
    assert jnp.allclose(iv_bar[:, 0], iv_r, atol=1e-3, rtol=1e-3)
    assert jnp.allclose(bv_bar, 0.0) and jnp.allclose(bv_x_bar, 0.0)

    print("KERNEL_OK")
</pallas_src>

<mosaic_0001>
module attributes {stable_mosaic.version = 11 : i64} {
  func.func @_pinn_ac_kernel(%arg0: i32, %arg1: memref<2x128xf32, #tpu.memory_space<vmem>>, %arg2: memref<32x2xf32, #tpu.memory_space<vmem>>, %arg3: memref<32x1xf32, #tpu.memory_space<vmem>>, %arg4: memref<3x32x32xf32, #tpu.memory_space<vmem>>, %arg5: memref<3x32x1xf32, #tpu.memory_space<vmem>>, %arg6: memref<1x32xf32, #tpu.memory_space<vmem>>, %arg7: memref<1x1xf32, #tpu.memory_space<vmem>>, %arg8: memref<5x128xf32, #tpu.memory_space<vmem>>, %arg9: memref<32x512xf32, #tpu.memory_space<vmem>>) attributes {dimension_semantics = [#tpu.dimension_semantics<parallel>], iteration_bounds = array<i64: 1>, scalar_prefetch = 0 : i64, scratch_operands = 1 : i64, tpu.core_type = #tpu.core_type<tc>, window_params = [{transform_indices = @transform_0, window_bounds = array<i64: 2, 128>}, {pipeline_mode = #tpu.pipeline_mode<synchronous>, transform_indices = @transform_1, window_bounds = array<i64: 32, 2>}, {pipeline_mode = #tpu.pipeline_mode<synchronous>, transform_indices = @transform_2, window_bounds = array<i64: 32, 1>}, {pipeline_mode = #tpu.pipeline_mode<synchronous>, transform_indices = @transform_3, window_bounds = array<i64: 3, 32, 32>}, {pipeline_mode = #tpu.pipeline_mode<synchronous>, transform_indices = @transform_4, window_bounds = array<i64: 3, 32, 1>}, {pipeline_mode = #tpu.pipeline_mode<synchronous>, transform_indices = @transform_5, window_bounds = array<i64: 1, 32>}, {pipeline_mode = #tpu.pipeline_mode<synchronous>, transform_indices = @transform_6, window_bounds = array<i64: 1, 1>}, {transform_indices = @transform_7, window_bounds = array<i64: 5, 128>}]} {
    %c0 = arith.constant 0 : index
    %c0_0 = arith.constant 0 : index
    %0 = vector.load %arg2[%c0, %c0_0] : memref<32x2xf32, #tpu.memory_space<vmem>>, vector<32x2xf32>
    %c0_1 = arith.constant 0 : index
    %c0_2 = arith.constant 0 : index
    %1 = vector.load %arg1[%c0_1, %c0_2] : memref<2x128xf32, #tpu.memory_space<vmem>>, vector<1x128xf32>
    %c1 = arith.constant 1 : index
    %c0_3 = arith.constant 0 : index
    %2 = vector.load %arg1[%c1, %c0_3] : memref<2x128xf32, #tpu.memory_space<vmem>>, vector<1x128xf32>
    %3 = vector.extract_strided_slice %0 {offsets = [0, 0], sizes = [32, 1], strides = [1, 1]} : vector<32x2xf32> to vector<32x1xf32>
    %4 = vector.extract_strided_slice %0 {offsets = [0, 1], sizes = [32, 1], strides = [1, 1]} : vector<32x2xf32> to vector<32x1xf32>
    %5 = vector.broadcast %3 : vector<32x1xf32> to vector<32x128xf32>
    %6 = vector.broadcast %1 : vector<1x128xf32> to vector<32x128xf32>
    %7 = arith.mulf %5, %6 : vector<32x128xf32>
    %8 = vector.broadcast %4 : vector<32x1xf32> to vector<32x128xf32>
    %9 = vector.broadcast %2 : vector<1x128xf32> to vector<32x128xf32>
    %10 = arith.mulf %8, %9 : vector<32x128xf32>
    %11 = arith.addf %7, %10 : vector<32x128xf32>
    %c0_4 = arith.constant 0 : index
    %c0_5 = arith.constant 0 : index
    %12 = vector.load %arg3[%c0_4, %c0_5] : memref<32x1xf32, #tpu.memory_space<vmem>>, vector<32x1xf32>
    %13 = vector.broadcast %12 : vector<32x1xf32> to vector<32x128xf32>
    %14 = arith.addf %11, %13 : vector<32x128xf32>
    %cst = arith.constant 5.000000e-01 : f32
    %15 = vector.broadcast %cst : f32 to vector<32x128xf32>
    %16 = arith.mulf %15, %14 : vector<32x128xf32>
    %17 = math.tanh %16 : vector<32x128xf32>
    %cst_6 = arith.constant 5.000000e-01 : f32
    %18 = vector.broadcast %cst_6 : f32 to vector<32x128xf32>
    %19 = arith.mulf %18, %17 : vector<32x128xf32>
    %cst_7 = arith.constant 5.000000e-01 : f32
    %20 = vector.broadcast %cst_7 : f32 to vector<32x128xf32>
    %21 = arith.addf %19, %20 : vector<32x128xf32>
    %cst_8 = arith.constant 1.000000e+00 : f32
    %22 = vector.broadcast %cst_8 : f32 to vector<32x128xf32>
    %23 = arith.subf %22, %21 : vector<32x128xf32>
    %24 = arith.mulf %21, %23 : vector<32x128xf32>
    %cst_9 = arith.constant 2.000000e+00 : f32
    %25 = vector.broadcast %cst_9 : f32 to vector<32x128xf32>
    %26 = arith.mulf %25, %21 : vector<32x128xf32>
    %cst_10 = arith.constant 1.000000e+00 : f32
    %27 = vector.broadcast %cst_10 : f32 to vector<32x128xf32>
    %28 = arith.subf %27, %26 : vector<32x128xf32>
    %29 = arith.mulf %24, %28 : vector<32x128xf32>
    %c0_11 = arith.constant 0 : index
    %c0_12 = arith.constant 0 : index
    %30 = vector.load %arg9[%c0_11, %c0_12] : memref<32x512xf32, #tpu.memory_space<vmem>>, vector<32x128xf32>
    tpu.vector_store %arg9[%c0_11, %c0_12], %21 {strides = array<i32>} : memref<32x512xf32, #tpu.memory_space<vmem>>, vector<32x128xf32>,
    %31 = vector.broadcast %3 : vector<32x1xf32> to vector<32x128xf32>
    %32 = arith.mulf %24, %31 : vector<32x128xf32>
    %c0_13 = arith.constant 0 : index
    %c128 = arith.constant 128 : index
    %33 = vector.load %arg9[%c0_13, %c128] : memref<32x512xf32, #tpu.memory_space<vmem>>, vector<32x128xf32>
    tpu.vector_store %arg9[%c0_13, %c128], %32 {strides = array<i32>} : memref<32x512xf32, #tpu.memory_space<vmem>>, vector<32x128xf32>,
    %34 = vector.broadcast %4 : vector<32x1xf32> to vector<32x128xf32>
    %35 = arith.mulf %24, %34 : vector<32x128xf32>
    %c0_14 = arith.constant 0 : index
    %c256 = arith.constant 256 : index
    %36 = vector.load %arg9[%c0_14, %c256] : memref<32x512xf32, #tpu.memory_space<vmem>>, vector<32x128xf32>
    tpu.vector_store %arg9[%c0_14, %c256], %35 {strides = array<i32>} : memref<32x512xf32, #tpu.memory_space<vmem>>, vector<32x128xf32>,
    %37 = arith.mulf %4, %4 : vector<32x1xf32>
    %38 = vector.broadcast %37 : vector<32x1xf32> to vector<32x128xf32>
    %39 = arith.mulf %29, %38 : vector<32x128xf32>
    %c0_15 = arith.constant 0 : index
    %c384 = arith.constant 384 : index
    %40 = vector.load %arg9[%c0_15, %c384] : memref<32x512xf32, #tpu.memory_space<vmem>>, vector<32x128xf32>
    tpu.vector_store %arg9[%c0_15, %c384], %39 {strides = array<i32>} : memref<32x512xf32, #tpu.memory_space<vmem>>, vector<32x128xf32>,
    %c0_16 = arith.constant 0 : index
    %c0_17 = arith.constant 0 : index
    %c0_18 = arith.constant 0 : index
    %41 = vector.load %arg4[%c0_16, %c0_17, %c0_18] : memref<3x32x32xf32, #tpu.memory_space<vmem>>, vector<1x32x32xf32>
    %42 = vector.shape_cast %41 : vector<1x32x32xf32> to vector<32x32xf32>
    %c0_19 = arith.constant 0 : index
    %c0_20 = arith.constant 0 : index
    %43 = vector.load %arg9[%c0_19, %c0_20] : memref<32x512xf32, #tpu.memory_space<vmem>>, vector<32x512xf32>
    %cst_21 = arith.constant dense<0.000000e+00> : vector<32x512xf32>
    %44 = tpu.matmul %42, %43, %cst_21 {dimension_numbers = #tpu.dot_dimension_numbers<[1], [0], [0], [1], [0, 0, 1, 1], [], []>} : vector<32x32xf32>, vector<32x512xf32>, vector<32x512xf32> -> vector<32x512xf32>
    %45 = vector.extract_strided_slice %44 {offsets = [0, 0], sizes = [32, 128], strides = [1, 1]} : vector<32x512xf32> to vector<32x128xf32>
    %c0_22 = arith.constant 0 : index
    %c0_23 = arith.constant 0 : index
    %c0_24 = arith.constant 0 : index
    %46 = vector.load %arg5[%c0_22, %c0_23, %c0_24] : memref<3x32x1xf32, #tpu.memory_space<vmem>>, vector<1x32x1xf32>
    %47 = vector.shape_cast %46 : vector<1x32x1xf32> to vector<32x1xf32>
    %48 = vector.broadcast %47 : vector<32x1xf32> to vector<32x128xf32>
    %49 = arith.addf %45, %48 : vector<32x128xf32>
    %50 = vector.extract_strided_slice %44 {offsets = [0, 128], sizes = [32, 128], strides = [1, 1]} : vector<32x512xf32> to vector<32x128xf32>
    %51 = vector.extract_strided_slice %44 {offsets = [0, 256], sizes = [32, 128], strides = [1, 1]} : vector<32x512xf32> to vector<32x128xf32>
    %52 = vector.extract_strided_slice %44 {offsets = [0, 384], sizes = [32, 128], strides = [1, 1]} : vector<32x512xf32> to vector<32x128xf32>
    %cst_25 = arith.constant 5.000000e-01 : f32
    %53 = vector.broadcast %cst_25 : f32 to vector<32x128xf32>
    %54 = arith.mulf %53, %49 : vector<32x128xf32>
    %55 = math.tanh %54 : vector<32x128xf32>
    %cst_26 = arith.constant 5.000000e-01 : f32
    %56 = vector.broadcast %cst_26 : f32 to vector<32x128xf32>
    %57 = arith.mulf %56, %55 : vector<32x128xf32>
    %cst_27 = arith.constant 5.000000e-01 : f32
    %58 = vector.broadcast %cst_27 : f32 to vector<32x128xf32>
    %59 = arith.addf %57, %58 : vector<32x128xf32>
    %cst_28 = arith.constant 1.000000e+00 : f32
    %60 = vector.broadcast %cst_28 : f32 to vector<32x128xf32>
    %61 = arith.subf %60, %59 : vector<32x128xf32>
    %62 = arith.mulf %59, %61 : vector<32x128xf32>
    %cst_29 = arith.constant 2.000000e+00 : f32
    %63 = vector.broadcast %cst_29 : f32 to vector<32x128xf32>
    %64 = arith.mulf %63, %59 : vector<32x128xf32>
    %cst_30 = arith.constant 1.000000e+00 : f32
    %65 = vector.broadcast %cst_30 : f32 to vector<32x128xf32>
    %66 = arith.subf %65, %64 : vector<32x128xf32>
    %67 = arith.mulf %62, %66 : vector<32x128xf32>
    %c0_31 = arith.constant 0 : index
    %c0_32 = arith.constant 0 : index
    %68 = vector.load %arg9[%c0_31, %c0_32] : memref<32x512xf32, #tpu.memory_space<vmem>>, vector<32x128xf32>
    tpu.vector_store %arg9[%c0_31, %c0_32], %59 {strides = array<i32>} : memref<32x512xf32, #tpu.memory_space<vmem>>, vector<32x128xf32>,
    %69 = arith.mulf %62, %50 : vector<32x128xf32>
    %c0_33 = arith.constant 0 : index
    %c128_34 = arith.constant 128 : index
    %70 = vector.load %arg9[%c0_33, %c128_34] : memref<32x512xf32, #tpu.memory_space<vmem>>, vector<32x128xf32>
    tpu.vector_store %arg9[%c0_33, %c128_34], %69 {strides = array<i32>} : memref<32x512xf32, #tpu.memory_space<vmem>>, vector<32x128xf32>,
    %71 = arith.mulf %62, %51 : vector<32x128xf32>
    %c0_35 = arith.constant 0 : index
    %c256_36 = arith.constant 256 : index
    %72 = vector.load %arg9[%c0_35, %c256_36] : memref<32x512xf32, #tpu.memory_space<vmem>>, vector<32x128xf32>
    tpu.vector_store %arg9[%c0_35, %c256_36], %71 {strides = array<i32>} : memref<32x512xf32, #tpu.memory_space<vmem>>, vector<32x128xf32>,
    %73 = arith.mulf %67, %51 : vector<32x128xf32>
    %74 = arith.mulf %73, %51 : vector<32x128xf32>
    %75 = arith.mulf %62, %52 : vector<32x128xf32>
    %76 = arith.addf %74, %75 : vector<32x128xf32>
    %c0_37 = arith.constant 0 : index
    %c384_38 = arith.constant 384 : index
    %77 = vector.load %arg9[%c0_37, %c384_38] : memref<32x512xf32, #tpu.memory_space<vmem>>, vector<32x128xf32>
    tpu.vector_store %arg9[%c0_37, %c384_38], %76 {strides = array<i32>} : memref<32x512xf32, #tpu.memory_space<vmem>>, vector<32x128xf32>,
    %c1_39 = arith.constant 1 : index
    %c0_40 = arith.constant 0 : index
    %c0_41 = arith.constant 0 : index
    %78 = vector.load %arg4[%c1_39, %c0_40, %c0_41] : memref<3x32x32xf32, #tpu.memory_space<vmem>>, vector<1x32x32xf32>
    %79 = vector.shape_cast %78 : vector<1x32x32xf32> to vector<32x32xf32>
    %c0_42 = arith.constant 0 : index
    %c0_43 = arith.constant 0 : index
    %80 = vector.load %arg9[%c0_42, %c0_43] : memref<32x512xf32, #tpu.memory_space<vmem>>, vector<32x512xf32>
    %cst_44 = arith.constant dense<0.000000e+00> : vector<32x512xf32>
    %81 = tpu.matmul %79, %80, %cst_44 {dimension_numbers = #tpu.dot_dimension_numbers<[1], [0], [0], [1], [0, 0, 1, 1], [], []>} : vector<32x32xf32>, vector<32x512xf32>, vector<32x512xf32> -> vector<32x512xf32>
    %82 = vector.extract_strided_slice %81 {offsets = [0, 0], sizes = [32, 128], strides = [1, 1]} : vector<32x512xf32> to vector<32x128xf32>
    %c1_45 = arith.constant 1 : index
    %c0_46 = arith.constant 0 : index
    %c0_47 = arith.constant 0 : index
    %83 = vector.load %arg5[%c1_45, %c0_46, %c0_47] : memref<3x32x1xf32, #tpu.memory_space<vmem>>, vector<1x32x1xf32>
    %84 = vector.shape_cast %83 : vector<1x32x1xf32> to vector<32x1xf32>
    %85 = vector.broadcast %84 : vector<32x1xf32> to vector<32x128xf32>
    %86 = arith.addf %82, %85 : vector<32x128xf32>
    %87 = vector.extract_strided_slice %81 {offsets = [0, 128], sizes = [32, 128], strides = [1, 1]} : vector<32x512xf32> to vector<32x128xf32>
    %88 = vector.extract_strided_slice %81 {offsets = [0, 256], sizes = [32, 128], strides = [1, 1]} : vector<32x512xf32> to vector<32x128xf32>
    %89 = vector.extract_strided_slice %81 {offsets = [0, 384], sizes = [32, 128], strides = [1, 1]} : vector<32x512xf32> to vector<32x128xf32>
    %cst_48 = arith.constant 5.000000e-01 : f32
    %90 = vector.broadcast %cst_48 : f32 to vector<32x128xf32>
    %91 = arith.mulf %90, %86 : vector<32x128xf32>
    %92 = math.tanh %91 : vector<32x128xf32>
    %cst_49 = arith.constant 5.000000e-01 : f32
    %93 = vector.broadcast %cst_49 : f32 to vector<32x128xf32>
    %94 = arith.mulf %93, %92 : vector<32x128xf32>
    %cst_50 = arith.constant 5.000000e-01 : f32
    %95 = vector.broadcast %cst_50 : f32 to vector<32x128xf32>
    %96 = arith.addf %94, %95 : vector<32x128xf32>
    %cst_51 = arith.constant 1.000000e+00 : f32
    %97 = vector.broadcast %cst_51 : f32 to vector<32x128xf32>
    %98 = arith.subf %97, %96 : vector<32x128xf32>
    %99 = arith.mulf %96, %98 : vector<32x128xf32>
    %cst_52 = arith.constant 2.000000e+00 : f32
    %100 = vector.broadcast %cst_52 : f32 to vector<32x128xf32>
    %101 = arith.mulf %100, %96 : vector<32x128xf32>
    %cst_53 = arith.constant 1.000000e+00 : f32
    %102 = vector.broadcast %cst_53 : f32 to vector<32x128xf32>
    %103 = arith.subf %102, %101 : vector<32x128xf32>
    %104 = arith.mulf %99, %103 : vector<32x128xf32>
    %c0_54 = arith.constant 0 : index
    %c0_55 = arith.constant 0 : index
    %105 = vector.load %arg9[%c0_54, %c0_55] : memref<32x512xf32, #tpu.memory_space<vmem>>, vector<32x128xf32>
    tpu.vector_store %arg9[%c0_54, %c0_55], %96 {strides = array<i32>} : memref<32x512xf32, #tpu.memory_space<vmem>>, vector<32x128xf32>,
    %106 = arith.mulf %99, %87 : vector<32x128xf32>
    %c0_56 = arith.constant 0 : index
    %c128_57 = arith.constant 128 : index
    %107 = vector.load %arg9[%c0_56, %c128_57] : memref<32x512xf32, #tpu.memory_space<vmem>>, vector<32x128xf32>
    tpu.vector_store %arg9[%c0_56, %c128_57], %106 {strides = array<i32>} : memref<32x512xf32, #tpu.memory_space<vmem>>, vector<32x128xf32>,
    %108 = arith.mulf %99, %88 : vector<32x128xf32>
    %c0_58 = arith.constant 0 : index
    %c256_59 = arith.constant 256 : index
    %109 = vector.load %arg9[%c0_58, %c256_59] : memref<32x512xf32, #tpu.memory_space<vmem>>, vector<32x128xf32>
    tpu.vector_store %arg9[%c0_58, %c256_59], %108 {strides = array<i32>} : memref<32x512xf32, #tpu.memory_space<vmem>>, vector<32x128xf32>,
    %110 = arith.mulf %104, %88 : vector<32x128xf32>
    %111 = arith.mulf %110, %88 : vector<32x128xf32>
    %112 = arith.mulf %99, %89 : vector<32x128xf32>
    %113 = arith.addf %111, %112 : vector<32x128xf32>
    %c0_60 = arith.constant 0 : index
    %c384_61 = arith.constant 384 : index
    %114 = vector.load %arg9[%c0_60, %c384_61] : memref<32x512xf32, #tpu.memory_space<vmem>>, vector<32x128xf32>
    tpu.vector_store %arg9[%c0_60, %c384_61], %113 {strides = array<i32>} : memref<32x512xf32, #tpu.memory_space<vmem>>, vector<32x128xf32>,
    %c2 = arith.constant 2 : index
    %c0_62 = arith.constant 0 : index
    %c0_63 = arith.constant 0 : index
    %115 = vector.load %arg4[%c2, %c0_62, %c0_63] : memref<3x32x32xf32, #tpu.memory_space<vmem>>, vector<1x32x32xf32>
    %116 = vector.shape_cast %115 : vector<1x32x32xf32> to vector<32x32xf32>
    %c0_64 = arith.constant 0 : index
    %c0_65 = arith.constant 0 : index
    %117 = vector.load %arg9[%c0_64, %c0_65] : memref<32x512xf32, #tpu.memory_space<vmem>>, vector<32x512xf32>
    %cst_66 = arith.constant dense<0.000000e+00> : vector<32x512xf32>
    %118 = tpu.matmul %116, %117, %cst_66 {dimension_numbers = #tpu.dot_dimension_numbers<[1], [0], [0], [1], [0, 0, 1, 1], [], []>} : vector<32x32xf32>, vector<32x512xf32>, vector<32x512xf32> -> vector<32x512xf32>
    %119 = vector.extract_strided_slice %118 {offsets = [0, 0], sizes = [32, 128], strides = [1, 1]} : vector<32x512xf32> to vector<32x128xf32>
    %c2_67 = arith.constant 2 : index
    %c0_68 = arith.constant 0 : index
    %c0_69 = arith.constant 0 : index
    %120 = vector.load %arg5[%c2_67, %c0_68, %c0_69] : memref<3x32x1xf32, #tpu.memory_space<vmem>>, vector<1x32x1xf32>
    %121 = vector.shape_cast %120 : vector<1x32x1xf32> to vector<32x1xf32>
    %122 = vector.broadcast %121 : vector<32x1xf32> to vector<32x128xf32>
    %123 = arith.addf %119, %122 : vector<32x128xf32>
    %124 = vector.extract_strided_slice %118 {offsets = [0, 128], sizes = [32, 128], strides = [1, 1]} : vector<32x512xf32> to vector<32x128xf32>
    %125 = vector.extract_strided_slice %118 {offsets = [0, 256], sizes = [32, 128], strides = [1, 1]} : vector<32x512xf32> to vector<32x128xf32>
    %126 = vector.extract_strided_slice %118 {offsets = [0, 384], sizes = [32, 128], strides = [1, 1]} : vector<32x512xf32> to vector<32x128xf32>
    %cst_70 = arith.constant 5.000000e-01 : f32
    %127 = vector.broadcast %cst_70 : f32 to vector<32x128xf32>
    %128 = arith.mulf %127, %123 : vector<32x128xf32>
    %129 = math.tanh %128 : vector<32x128xf32>
    %cst_71 = arith.constant 5.000000e-01 : f32
    %130 = vector.broadcast %cst_71 : f32 to vector<32x128xf32>
    %131 = arith.mulf %130, %129 : vector<32x128xf32>
    %cst_72 = arith.constant 5.000000e-01 : f32
    %132 = vector.broadcast %cst_72 : f32 to vector<32x128xf32>
    %133 = arith.addf %131, %132 : vector<32x128xf32>
    %cst_73 = arith.constant 1.000000e+00 : f32
    %134 = vector.broadcast %cst_73 : f32 to vector<32x128xf32>
    %135 = arith.subf %134, %133 : vector<32x128xf32>
    %136 = arith.mulf %133, %135 : vector<32x128xf32>
    %cst_74 = arith.constant 2.000000e+00 : f32
    %137 = vector.broadcast %cst_74 : f32 to vector<32x128xf32>
    %138 = arith.mulf %137, %133 : vector<32x128xf32>
    %cst_75 = arith.constant 1.000000e+00 : f32
    %139 = vector.broadcast %cst_75 : f32 to vector<32x128xf32>
    %140 = arith.subf %139, %138 : vector<32x128xf32>
    %141 = arith.mulf %136, %140 : vector<32x128xf32>
    %c0_76 = arith.constant 0 : index
    %c0_77 = arith.constant 0 : index
    %142 = vector.load %arg9[%c0_76, %c0_77] : memref<32x512xf32, #tpu.memory_space<vmem>>, vector<32x128xf32>
    tpu.vector_store %arg9[%c0_76, %c0_77], %133 {strides = array<i32>} : memref<32x512xf32, #tpu.memory_space<vmem>>, vector<32x128xf32>,
    %143 = arith.mulf %136, %124 : vector<32x128xf32>
    %c0_78 = arith.constant 0 : index
    %c128_79 = arith.constant 128 : index
    %144 = vector.load %arg9[%c0_78, %c128_79] : memref<32x512xf32, #tpu.memory_space<vmem>>, vector<32x128xf32>
    tpu.vector_store %arg9[%c0_78, %c128_79], %143 {strides = array<i32>} : memref<32x512xf32, #tpu.memory_space<vmem>>, vector<32x128xf32>,
    %145 = arith.mulf %136, %125 : vector<32x128xf32>
    %c0_80 = arith.constant 0 : index
    %c256_81 = arith.constant 256 : index
    %146 = vector.load %arg9[%c0_80, %c256_81] : memref<32x512xf32, #tpu.memory_space<vmem>>, vector<32x128xf32>
    tpu.vector_store %arg9[%c0_80, %c256_81], %145 {strides = array<i32>} : memref<32x512xf32, #tpu.memory_space<vmem>>, vector<32x128xf32>,
    %147 = arith.mulf %141, %125 : vector<32x128xf32>
    %148 = arith.mulf %147, %125 : vector<32x128xf32>
    %149 = arith.mulf %136, %126 : vector<32x128xf32>
    %150 = arith.addf %148, %149 : vector<32x128xf32>
    %c0_82 = arith.constant 0 : index
    %c384_83 = arith.constant 384 : index
    %151 = vector.load %arg9[%c0_82, %c384_83] : memref<32x512xf32, #tpu.memory_space<vmem>>, vector<32x128xf32>
    tpu.vector_store %arg9[%c0_82, %c384_83], %150 {strides = array<i32>} : memref<32x512xf32, #tpu.memory_space<vmem>>, vector<32x128xf32>,
    %c0_84 = arith.constant 0 : index
    %c0_85 = arith.constant 0 : index
    %152 = vector.load %arg6[%c0_84, %c0_85] : memref<1x32xf32, #tpu.memory_space<vmem>>, vector<1x32xf32>
    %c0_86 = arith.constant 0 : index
    %c0_87 = arith.constant 0 : index
    %153 = vector.load %arg9[%c0_86, %c0_87] : memref<32x512xf32, #tpu.memory_space<vmem>>, vector<32x512xf32>
    %cst_88 = arith.constant dense<0.000000e+00> : vector<1x512xf32>
    %154 = tpu.matmul %152, %153, %cst_88 {dimension_numbers = #tpu.dot_dimension_numbers<[1], [0], [0], [1], [0, 0, 1, 1], [], []>} : vector<1x32xf32>, vector<32x512xf32>, vector<1x512xf32> -> vector<1x512xf32>
    %155 = vector.extract_strided_slice %154 {offsets = [0, 0], sizes = [1, 128], strides = [1, 1]} : vector<1x512xf32> to vector<1x128xf32>
    %c0_89 = arith.constant 0 : index
    %c0_90 = arith.constant 0 : index
    %156 = vector.load %arg7[%c0_89, %c0_90] : memref<1x1xf32, #tpu.memory_space<vmem>>, vector<1x1xf32>
    %157 = vector.broadcast %156 : vector<1x1xf32> to vector<1x128xf32>
    %158 = arith.addf %155, %157 : vector<1x128xf32>
    %159 = vector.extract_strided_slice %154 {offsets = [0, 128], sizes = [1, 128], strides = [1, 1]} : vector<1x512xf32> to vector<1x128xf32>
    %160 = vector.extract_strided_slice %154 {offsets = [0, 256], sizes = [1, 128], strides = [1, 1]} : vector<1x512xf32> to vector<1x128xf32>
    %161 = vector.extract_strided_slice %154 {offsets = [0, 384], sizes = [1, 128], strides = [1, 1]} : vector<1x512xf32> to vector<1x128xf32>
    %cst_91 = arith.constant 9.99999974E-5 : f32
    %162 = vector.broadcast %cst_91 : f32 to vector<1x128xf32>
    %163 = arith.mulf %162, %161 : vector<1x128xf32>
    %164 = arith.subf %159, %163 : vector<1x128xf32>
    %cst_92 = arith.constant 5.000000e+00 : f32
    %165 = vector.broadcast %cst_92 : f32 to vector<1x128xf32>
    %166 = arith.mulf %165, %158 : vector<1x128xf32>
    %167 = arith.mulf %166, %158 : vector<1x128xf32>
    %168 = arith.mulf %167, %158 : vector<1x128xf32>
    %169 = arith.addf %164, %168 : vector<1x128xf32>
    %cst_93 = arith.constant 5.000000e+00 : f32
    %170 = vector.broadcast %cst_93 : f32 to vector<1x128xf32>
    %171 = arith.mulf %170, %158 : vector<1x128xf32>
    %172 = arith.subf %169, %171 : vector<1x128xf32>
    %c0_94 = arith.constant 0 : index
    %c0_95 = arith.constant 0 : index
    %173 = vector.load %arg8[%c0_94, %c0_95] : memref<5x128xf32, #tpu.memory_space<vmem>>, vector<1x128xf32>
    tpu.vector_store %arg8[%c0_94, %c0_95], %158 {strides = array<i32>} : memref<5x128xf32, #tpu.memory_space<vmem>>, vector<1x128xf32>,
    %c1_96 = arith.constant 1 : index
    %c0_97 = arith.constant 0 : index
    %174 = vector.load %arg8[%c1_96, %c0_97] : memref<5x128xf32, #tpu.memory_space<vmem>>, vector<1x128xf32>
    tpu.vector_store %arg8[%c1_96, %c0_97], %159 {strides = array<i32>} : memref<5x128xf32, #tpu.memory_space<vmem>>, vector<1x128xf32>,
    %c2_98 = arith.constant 2 : index
    %c0_99 = arith.constant 0 : index
    %175 = vector.load %arg8[%c2_98, %c0_99] : memref<5x128xf32, #tpu.memory_space<vmem>>, vector<1x128xf32>
    tpu.vector_store %arg8[%c2_98, %c0_99], %160 {strides = array<i32>} : memref<5x128xf32, #tpu.memory_space<vmem>>, vector<1x128xf32>,
    %c3 = arith.constant 3 : index
    %c0_100 = arith.constant 0 : index
    %176 = vector.load %arg8[%c3, %c0_100] : memref<5x128xf32, #tpu.memory_space<vmem>>, vector<1x128xf32>
    tpu.vector_store %arg8[%c3, %c0_100], %161 {strides = array<i32>} : memref<5x128xf32, #tpu.memory_space<vmem>>, vector<1x128xf32>,
    %c4 = arith.constant 4 : index
    %c0_101 = arith.constant 0 : index
    %177 = vector.load %arg8[%c4, %c0_101] : memref<5x128xf32, #tpu.memory_space<vmem>>, vector<1x128xf32>
    tpu.vector_store %arg8[%c4, %c0_101], %172 {strides = array<i32>} : memref<5x128xf32, #tpu.memory_space<vmem>>, vector<1x128xf32>,
    return
  }
  func.func @transform_0(%arg0: i32) -> (i32, i32) {
    %c0_i32 = arith.constant 0 : i32
    %c0_i32_0 = arith.constant 0 : i32
    return %c0_i32, %arg0 : i32, i32
  }
  func.func @transform_1(%arg0: i32) -> (i32, i32) {
    %c0_i32 = arith.constant 0 : i32
    %c0_i32_0 = arith.constant 0 : i32
    %c0_i32_1 = arith.constant 0 : i32
    return %c0_i32, %c0_i32_0 : i32, i32
  }
  func.func @transform_2(%arg0: i32) -> (i32, i32) {
    %c0_i32 = arith.constant 0 : i32
    %c0_i32_0 = arith.constant 0 : i32
    %c0_i32_1 = arith.constant 0 : i32
    return %c0_i32, %c0_i32_0 : i32, i32
  }
  func.func @transform_3(%arg0: i32) -> (i32, i32, i32) {
    %c0_i32 = arith.constant 0 : i32
    %c0_i32_0 = arith.constant 0 : i32
    %c0_i32_1 = arith.constant 0 : i32
    %c0_i32_2 = arith.constant 0 : i32
    return %c0_i32, %c0_i32_0, %c0_i32_1 : i32, i32, i32
  }
  func.func @transform_4(%arg0: i32) -> (i32, i32, i32) {
    %c0_i32 = arith.constant 0 : i32
    %c0_i32_0 = arith.constant 0 : i32
    %c0_i32_1 = arith.constant 0 : i32
    %c0_i32_2 = arith.constant 0 : i32
    return %c0_i32, %c0_i32_0, %c0_i32_1 : i32, i32, i32
  }
  func.func @transform_5(%arg0: i32) -> (i32, i32) {
    %c0_i32 = arith.constant 0 : i32
    %c0_i32_0 = arith.constant 0 : i32
    %c0_i32_1 = arith.constant 0 : i32
    return %c0_i32, %c0_i32_0 : i32, i32
  }
  func.func @transform_6(%arg0: i32) -> (i32, i32) {
    %c0_i32 = arith.constant 0 : i32
    %c0_i32_0 = arith.constant 0 : i32
    %c0_i32_1 = arith.constant 0 : i32
    return %c0_i32, %c0_i32_0 : i32, i32
  }
  func.func @transform_7(%arg0: i32) -> (i32, i32) {
    %c0_i32 = arith.constant 0 : i32
    %c0_i32_0 = arith.constant 0 : i32
    return %c0_i32, %arg0 : i32, i32
  }
}

</mosaic_0001>

<llo_original>
// kernel: pinn_ac_forward.1
$region0: #{pinn_ac_forward.1}
  #allocation0 [shape = 'u32[]', space=smem, size = 0x4, offset = 0x4, fixed_abs, tag = 'smem constant byte address 0x4 - core index']
  #allocation1 [shape = 'u32[144,128]{1,0:T(1,128)}', space=vmem, size = 0x12000, scoped, tag = 'internal scratch']
  #allocation2 [shape = 'f32[32,512]{1,0:T(8,128)}', space=vmem, size = 0x10000, scoped, tag = 'scratch operand']
  #allocation3 [shape = 'f32[1,1]{1,0:T(1,128)S(1)}', space=vmem, size = 0x200, scoped, tag = 'scoped memory for pinn_ac_forward.1']
  %s0 = inlined_call_operand.vmem [shape: f32[2,128], index: 0, kind: input, shape index: {}]
  %s1 = inlined_call_operand.vmem [shape: f32[32,2], index: 1, kind: input, shape index: {}]
  %s2 = inlined_call_operand.vmem [shape: f32[32,1], index: 2, kind: input, shape index: {}]
  %s3 = inlined_call_operand.vmem [shape: f32[3,32,32], index: 3, kind: input, shape index: {}]
  %s4 = inlined_call_operand.vmem [shape: f32[3,32,1], index: 4, kind: input, shape index: {}]
  %s5 = inlined_call_operand.vmem [shape: f32[1,32], index: 5, kind: input, shape index: {}]
  %s6 = inlined_call_operand.<no memory space> [shape: f32[1,1], index: 6, kind: input, shape index: {}]
  %s7 = inlined_call_operand.vmem [shape: f32[5,128], index: 7, kind: output, shape index: {}]
  %s8 = sld [smem:[#allocation0]]
  $region38: #{pinn_ac_forward.1} parent=0
    _
  %s10 = ssub.s32 1, %s8
  %s11 = scalar_select 0, %s10, %s8
  %v12 = vstv %s6
  %13 = vst [vmem:[#allocation3] sm:$0x1] %v12
  // Predicated region
  $region2: #{pinn_ac_forward.1} parent=0 // pred_check
    _
  $region3: #{pinn_ac_forward.1} parent=0 // pred_check_branch
    %15 = sbr.rel (0) target = $region5
  $region4: #{pinn_ac_forward.1} parent=0 // pred_region
    _
  $region5: #{pinn_ac_forward.1} parent=0 // pred_fallthru
    _
  // Predicated region
  $region6: #{pinn_ac_forward.1} parent=0 // pred_check
    _
  $region7: #{pinn_ac_forward.1} parent=0 // pred_check_branch
    %17 = sbr.rel (0) target = $region9
  $region8: #{pinn_ac_forward.1} parent=0 // pred_region
    _
  $region9: #{pinn_ac_forward.1} parent=0 // pred_fallthru
    _
  // Predicated region
  $region10: #{pinn_ac_forward.1} parent=0 // pred_check
    _
  $region11: #{pinn_ac_forward.1} parent=0 // pred_check_branch
    %19 = sbr.rel (0) target = $region13
  $region12: #{pinn_ac_forward.1} parent=0 // pred_region
    _
  $region13: #{pinn_ac_forward.1} parent=0 // pred_fallthru
    _
  // Predicated region
  $region14: #{pinn_ac_forward.1} parent=0 // pred_check
    _
  $region15: #{pinn_ac_forward.1} parent=0 // pred_check_branch
    %21 = sbr.rel (0) target = $region17
  $region16: #{pinn_ac_forward.1} parent=0 // pred_region
    _
  $region17: #{pinn_ac_forward.1} parent=0 // pred_fallthru
    _
  // Predicated region
  $region18: #{pinn_ac_forward.1} parent=0 // pred_check
    _
  $region19: #{pinn_ac_forward.1} parent=0 // pred_check_branch
    %23 = sbr.rel (0) target = $region21
  $region20: #{pinn_ac_forward.1} parent=0 // pred_region
    _
  $region21: #{pinn_ac_forward.1} parent=0 // pred_fallthru
    _
  // Predicated region
  $region22: #{pinn_ac_forward.1} parent=0 // pred_check
    _
  $region23: #{pinn_ac_forward.1} parent=0 // pred_check_branch
    %25 = sbr.rel (0) target = $region25
  $region24: #{pinn_ac_forward.1} parent=0 // pred_region
    _
  $region25: #{pinn_ac_forward.1} parent=0 // pred_fallthru
    _
  // Predicated region
  $region26: #{pinn_ac_forward.1} parent=0 // pred_check
    _
  $region27: #{pinn_ac_forward.1} parent=0 // pred_check_branch
    %27 = sbr.rel (0) target = $region29
  $region28: #{pinn_ac_forward.1} parent=0 // pred_region
    _
  $region29: #{pinn_ac_forward.1} parent=0 // pred_fallthru
    _
  %v28 = vld [vmem:[%s1] sm:$0xff]
  %v29 = vld [vmem:[%s1 + $0x8] sm:$0xff]
  %v30 = vld [vmem:[%s1 + $0x10] sm:$0xff]
  %v31 = vld [vmem:[%s1 + $0x18] sm:$0xff]
  %v32 = vld [vmem:[%s0] sm:$0x1]
  %v33 = vld [vmem:[%s0 + $0x1] sm:$0x1]
  %35 = vset.pattern.permute.xlu0 0
  %36 = vperm.xlu0 %35, %v28
  %v37 = vpop.permute.xlu0 %36
  %40 = vset.pattern.permute.xlu0 0
  %41 = vperm.xlu0 %40, %v29
  %v42 = vpop.permute.xlu0 %41
  %45 = vset.pattern.permute.xlu0 0
  %46 = vperm.xlu0 %45, %v30
  %v47 = vpop.permute.xlu0 %46
  %50 = vset.pattern.permute.xlu0 0
  %51 = vperm.xlu0 %50, %v31
  %v52 = vpop.permute.xlu0 %51
  %v54 = vlaneseq
  %v55 = vshrl.u32 %v54, 7
  %v56 = vsub.s32 0, %v55
  %v57 = vrot.slane %v32, %v56
  %v58 = vmul.f32 %v37, %v57
  %v59 = vmul.f32 %v42, %v57
  %v60 = vmul.f32 %v47, %v57
  %v61 = vmul.f32 %v52, %v57
  %62 = vset.pattern.permute.xlu0 1
  %63 = vperm.xlu0 %62, %v28
  %v64 = vpop.permute.xlu0 %63
  %66 = vset.pattern.permute.xlu0 1
  %67 = vperm.xlu0 %66, %v29
  %v68 = vpop.permute.xlu0 %67
  %70 = vset.pattern.permute.xlu0 1
  %71 = vperm.xlu0 %70, %v30
  %v72 = vpop.permute.xlu0 %71
  %74 = vset.pattern.permute.xlu0 1
  %75 = vperm.xlu0 %74, %v31
  %v76 = vpop.permute.xlu0 %75
  %v78 = vlaneseq
  %v79 = vshrl.u32 %v78, 7
  %v80 = vsub.s32 0, %v79
  %v81 = vrot.slane %v33, %v80
  %v82 = vmul.f32 %v64, %v81
  %v83 = vmul.f32 %v68, %v81
  %v84 = vmul.f32 %v72, %v81
  %v85 = vmul.f32 %v76, %v81
  %v86 = vadd.f32 %v58, %v82
  %v87 = vadd.f32 %v59, %v83
  %v88 = vadd.f32 %v60, %v84
  %v89 = vadd.f32 %v61, %v85
  %v90 = vld [vmem:[%s2] sm:$0xff]
  %v91 = vld [vmem:[%s2 + $0x8] sm:$0xff]
  %v92 = vld [vmem:[%s2 + $0x10] sm:$0xff]
  %v93 = vld [vmem:[%s2 + $0x18] sm:$0xff]
  %95 = vset.pattern.permute.xlu0 0
  %96 = vperm.xlu0 %95, %v90
  %v97 = vpop.permute.xlu0 %96
  %100 = vset.pattern.permute.xlu0 0
  %101 = vperm.xlu0 %100, %v91
  %v102 = vpop.permute.xlu0 %101
  %105 = vset.pattern.permute.xlu0 0
  %106 = vperm.xlu0 %105, %v92
  %v107 = vpop.permute.xlu0 %106
  %110 = vset.pattern.permute.xlu0 0
  %111 = vperm.xlu0 %110, %v93
  %v112 = vpop.permute.xlu0 %111
  %v114 = vadd.f32 %v86, %v97
  %v115 = vadd.f32 %v87, %v102
  %v116 = vadd.f32 %v88, %v107
  %v117 = vadd.f32 %v89, %v112
  %v118 = vmul.f32 %v114, 0.5
  %v119 = vmul.f32 %v115, 0.5
  %v120 = vmul.f32 %v116, 0.5
  %v121 = vmul.f32 %v117, 0.5
  %v122 = vtanh.pop %v118
  %v123 = vtanh.pop %v119
  %v124 = vtanh.pop %v120
  %v125 = vtanh.pop %v121
  %v126 = vmul.f32 %v122, 0.5
  %v127 = vmul.f32 %v123, 0.5
  %v128 = vmul.f32 %v124, 0.5
  %v129 = vmul.f32 %v125, 0.5
  %v130 = vadd.f32 %v126, 0.5
  %v131 = vadd.f32 %v127, 0.5
  %v132 = vadd.f32 %v128, 0.5
  %v133 = vadd.f32 %v129, 0.5
  %v134 = vsub.f32 1.0, %v130
  %v135 = vsub.f32 1.0, %v131
  %v136 = vsub.f32 1.0, %v132
  %v137 = vsub.f32 1.0, %v133
  %v138 = vmul.f32 %v130, %v134
  %v139 = vmul.f32 %v131, %v135
  %v140 = vmul.f32 %v132, %v136
  %v141 = vmul.f32 %v133, %v137
  %v142 = vmul.f32 %v130, 2.0
  %v143 = vmul.f32 %v131, 2.0
  %v144 = vmul.f32 %v132, 2.0
  %v145 = vmul.f32 %v133, 2.0
  %v146 = vsub.f32 1.0, %v142
  %v147 = vsub.f32 1.0, %v143
  %v148 = vsub.f32 1.0, %v144
  %v149 = vsub.f32 1.0, %v145
  %v150 = vmul.f32 %v138, %v146
  %v151 = vmul.f32 %v139, %v147
  %v152 = vmul.f32 %v140, %v148
  %v153 = vmul.f32 %v141, %v149
  %154 = vst [vmem:[#allocation2] sm:$0xff] %v130
  %155 = vst [vmem:[#allocation2 + $0x20] sm:$0xff] %v131
  %156 = vst [vmem:[#allocation2 + $0x40] sm:$0xff] %v132
  %157 = vst [vmem:[#allocation2 + $0x60] sm:$0xff] %v133
  %v158 = vmul.f32 %v138, %v37
  %v159 = vmul.f32 %v139, %v42
  %v160 = vmul.f32 %v140, %v47
  %v161 = vmul.f32 %v141, %v52
  %162 = vst [vmem:[#allocation2 + $0x8] sm:$0xff] %v158
  %163 = vst [vmem:[#allocation2 + $0x28] sm:$0xff] %v159
  %164 = vst [vmem:[#allocation2 + $0x48] sm:$0xff] %v160
  %165 = vst [vmem:[#allocation2 + $0x68] sm:$0xff] %v161
  %v166 = vmul.f32 %v138, %v64
  %v167 = vmul.f32 %v139, %v68
  %v168 = vmul.f32 %v140, %v72
  %v169 = vmul.f32 %v141, %v76
  %170 = vst [vmem:[#allocation2 + $0x10] sm:$0xff] %v166
  %171 = vst [vmem:[#allocation2 + $0x30] sm:$0xff] %v167
  %172 = vst [vmem:[#allocation2 + $0x50] sm:$0xff] %v168
  %173 = vst [vmem:[#allocation2 + $0x70] sm:$0xff] %v169
  %v174 = vmul.f32 %v28, %v28
  %v175 = vmul.f32 %v29, %v29
  %v176 = vmul.f32 %v30, %v30
  %v177 = vmul.f32 %v31, %v31
  %179 = vset.pattern.permute.xlu0 1
  %180 = vperm.xlu0 %179, %v174
  %v181 = vpop.permute.xlu0 %180
  %184 = vset.pattern.permute.xlu0 1
  %185 = vperm.xlu0 %184, %v175
  %v186 = vpop.permute.xlu0 %185
  %189 = vset.pattern.permute.xlu0 1
  %190 = vperm.xlu0 %189, %v176
  %v191 = vpop.permute.xlu0 %190
  %194 = vset.pattern.permute.xlu0 1
  %195 = vperm.xlu0 %194, %v177
  %v196 = vpop.permute.xlu0 %195
  %v198 = vmul.f32 %v150, %v181
  %v199 = vmul.f32 %v151, %v186
  %v200 = vmul.f32 %v152, %v191
  %v201 = vmul.f32 %v153, %v196
  %202 = vst [vmem:[#allocation2 + $0x18] sm:$0xff] %v198
  %203 = vst [vmem:[#allocation2 + $0x38] sm:$0xff] %v199
  %204 = vst [vmem:[#allocation2 + $0x58] sm:$0xff] %v200
  %205 = vst [vmem:[#allocation2 + $0x78] sm:$0xff] %v201
  %v206 = vld [vmem:[%s3] sm:$0xff]
  %v207 = vld [vmem:[%s3 + $0x8] sm:$0xff]
  %v208 = vld [vmem:[%s3 + $0x10] sm:$0xff]
  %v209 = vld [vmem:[%s3 + $0x18] sm:$0xff]
  %v210 = vld [vmem:[#allocation2] sm:$0xff]
  %v211 = vld [vmem:[#allocation2 + $0x8] sm:$0xff]
  %v212 = vld [vmem:[#allocation2 + $0x10] sm:$0xff]
  %v213 = vld [vmem:[#allocation2 + $0x18] sm:$0xff]
  %v214 = vld [vmem:[#allocation2 + $0x20] sm:$0xff]
  %v215 = vld [vmem:[#allocation2 + $0x28] sm:$0xff]
  %v216 = vld [vmem:[#allocation2 + $0x30] sm:$0xff]
  %v217 = vld [vmem:[#allocation2 + $0x38] sm:$0xff]
  %v218 = vld [vmem:[#allocation2 + $0x40] sm:$0xff]
  %v219 = vld [vmem:[#allocation2 + $0x48] sm:$0xff]
  %v220 = vld [vmem:[#allocation2 + $0x50] sm:$0xff]
  %v221 = vld [vmem:[#allocation2 + $0x58] sm:$0xff]
  %v222 = vld [vmem:[#allocation2 + $0x60] sm:$0xff]
  %v223 = vld [vmem:[#allocation2 + $0x68] sm:$0xff]
  %v224 = vld [vmem:[#allocation2 + $0x70] sm:$0xff]
  %v225 = vld [vmem:[#allocation2 + $0x78] sm:$0xff]
  %vm226 = vcmask 261120
  %v228 = vsel %vm226, %v206, 0
  %v231 = vsel %vm226, %v207, 0
  %v234 = vsel %vm226, %v208, 0
  %v237 = vsel %vm226, %v209, 0
  %239 = vmatprep.subr.mxu0 0.0
  %240 = vmatpush1.msra.mxu0 0.0
  %241 = vmatprep.subr.mxu0 0.0
  %242 = vmatpush1.msra.mxu0 0.0
  %243 = vmatprep.subr.mxu0 0.0
  %244 = vmatpush1.msra.mxu0 0.0
  %245 = vmatprep.subr.mxu0 0.0
  %246 = vmatpush1.msra.mxu0 0.0
  %247 = vmatprep.subr.mxu0 0.0
  %248 = vmatpush1.msra.mxu0 0.0
  %249 = vmatprep.subr.mxu0 0.0
  %250 = vmatpush1.msra.mxu0 0.0
  %251 = vmatprep.subr.mxu0 0.0
  %252 = vmatpush1.msra.mxu0 0.0
  %253 = vmatprep.subr.mxu0 0.0
  %254 = vmatpush1.msra.mxu0 0.0
  %255 = vmatprep.subr.mxu0 0.0
  %256 = vmatpush1.msra.mxu0 0.0
  %257 = vmatprep.subr.mxu0 0.0
  %258 = vmatpush1.msra.mxu0 0.0
  %259 = vmatprep.subr.mxu0 0.0
  %260 = vmatpush1.msra.mxu0 0.0
  %261 = vmatprep.subr.mxu0 0.0
  %262 = vmatpush1.msra.mxu0 0.0
  %263 = vmatprep.subr.mxu0 %v223
  %264 = vmatpush1.msra.mxu0 %v222
  %265 = vmatprep.subr.mxu0 %v219
  %266 = vmatpush1.msra.mxu0 %v218
  %267 = vmatprep.subr.mxu0 %v215
  %268 = vmatpush1.msra.mxu0 %v214
  %269 = vmatprep.subr.mxu0 %v211
  %270 = vmatpush1.msra.mxu0 %v210
  %271 = vmatprep.subr.mxu0 0.0
  %272 = vmatpush2.msra.mxu0 0.0
  %273 = vmatprep.subr.mxu0 0.0
  %274 = vmatpush2.msra.mxu0 0.0
  %275 = vmatprep.subr.mxu0 0.0
  %276 = vmatpush2.msra.mxu0 0.0
  %277 = vmatprep.subr.mxu0 0.0
  %278 = vmatpush2.msra.mxu0 0.0
  %279 = vmatprep.subr.mxu0 0.0
  %280 = vmatpush2.msra.mxu0 0.0
  %281 = vmatprep.subr.mxu0 0.0
  %282 = vmatpush2.msra.mxu0 0.0
  %283 = vmatprep.subr.mxu0 0.0
  %284 = vmatpush2.msra.mxu0 0.0
  %285 = vmatprep.subr.mxu0 0.0
  %286 = vmatpush2.msra.mxu0 0.0
  %287 = vmatprep.subr.mxu0 0.0
  %288 = vmatpush2.msra.mxu0 0.0
  %289 = vmatprep.subr.mxu0 0.0
  %290 = vmatpush2.msra.mxu0 0.0
  %291 = vmatprep.subr.mxu0 0.0
  %292 = vmatpush2.msra.mxu0 0.0
  %293 = vmatprep.subr.mxu0 0.0
  %294 = vmatpush2.msra.mxu0 0.0
  %295 = vmatprep.subr.mxu0 0.0
  %296 = vmatpush2.msra.mxu0 0.0
  %297 = vmatprep.subr.mxu0 0.0
  %298 = vmatpush2.msra.mxu0 0.0
  %299 = vmatprep.subr.mxu0 0.0
  %300 = vmatpush2.msra.mxu0 0.0
  %301 = vmatprep.subr.mxu0 0.0
  %302 = vmatpush2.msra.mxu0 0.0
  %303 = vmatprep.mubr.f32.mxu0 0.0
  %304 = vmatmul.mubr.f32.gmra.mxu0 %v228
  %v305 = vpop.f32.mrf.mxu0
  %v306 = vadd.f32 0.0, %v305
  %v307 = vpop.f32.mrf.mxu0
  %v308 = vadd.f32 0.0, %v307
  %309 = vmatprep.mubr.f32.mxu0 0.0
  %310 = vmatmul.mubr.f32.gmra.mxu0 %v231
  %v311 = vpop.f32.mrf.mxu0
  %v312 = vadd.f32 0.0, %v311
  %v313 = vpop.f32.mrf.mxu0
  %v314 = vadd.f32 0.0, %v313
  %315 = vmatprep.mubr.f32.mxu0 0.0
  %316 = vmatmul.mubr.f32.gmra.mxu0 %v234
  %v317 = vpop.f32.mrf.mxu0
  %v318 = vadd.f32 0.0, %v317
  %v319 = vpop.f32.mrf.mxu0
  %v320 = vadd.f32 0.0, %v319
  %321 = vmatprep.mubr.f32.mxu0 0.0
  %322 = vmatmul.mubr.f32.gmra.mxu0 %v237
  %v323 = vpop.f32.mrf.mxu0
  %v324 = vadd.f32 0.0, %v323
  %v325 = vpop.f32.mrf.mxu0
  %v326 = vadd.f32 0.0, %v325
  %327 = vdwg.mxu0
  %328 = vmatprep.subr.mxu0 0.0
  %329 = vmatpush1.msra.mxu0 0.0
  %330 = vmatprep.subr.mxu0 0.0
  %331 = vmatpush1.msra.mxu0 0.0
  %332 = vmatprep.subr.mxu0 0.0
  %333 = vmatpush1.msra.mxu0 0.0
  %334 = vmatprep.subr.mxu0 0.0
  %335 = vmatpush1.msra.mxu0 0.0
  %336 = vmatprep.subr.mxu0 0.0
  %337 = vmatpush1.msra.mxu0 0.0
  %338 = vmatprep.subr.mxu0 0.0
  %339 = vmatpush1.msra.mxu0 0.0
  %340 = vmatprep.subr.mxu0 0.0
  %341 = vmatpush1.msra.mxu0 0.0
  %342 = vmatprep.subr.mxu0 0.0
  %343 = vmatpush1.msra.mxu0 0.0
  %344 = vmatprep.subr.mxu0 0.0
  %345 = vmatpush1.msra.mxu0 0.0
  %346 = vmatprep.subr.mxu0 0.0
  %347 = vmatpush1.msra.mxu0 0.0
  %348 = vmatprep.subr.mxu0 0.0
  %349 = vmatpush1.msra.mxu0 0.0
  %350 = vmatprep.subr.mxu0 0.0
  %351 = vmatpush1.msra.mxu0 0.0
  %352 = vmatprep.subr.mxu0 %v225
  %353 = vmatpush1.msra.mxu0 %v224
  %354 = vmatprep.subr.mxu0 %v221
  %355 = vmatpush1.msra.mxu0 %v220
  %356 = vmatprep.subr.mxu0 %v217
  %357 = vmatpush1.msra.mxu0 %v216
  %358 = vmatprep.subr.mxu0 %v213
  %359 = vmatpush1.msra.mxu0 %v212
  %360 = vmatprep.subr.mxu0 0.0
  %361 = vmatpush2.msra.mxu0 0.0
  %362 = vmatprep.subr.mxu0 0.0
  %363 = vmatpush2.msra.mxu0 0.0
  %364 = vmatprep.subr.mxu0 0.0
  %365 = vmatpush2.msra.mxu0 0.0
  %366 = vmatprep.subr.mxu0 0.0
  %367 = vmatpush2.msra.mxu0 0.0
  %368 = vmatprep.subr.mxu0 0.0
  %369 = vmatpush2.msra.mxu0 0.0
  %370 = vmatprep.subr.mxu0 0.0
  %371 = vmatpush2.msra.mxu0 0.0
  %372 = vmatprep.subr.mxu0 0.0
  %373 = vmatpush2.msra.mxu0 0.0
  %374 = vmatprep.subr.mxu0 0.0
  %375 = vmatpush2.msra.mxu0 0.0
  %376 = vmatprep.subr.mxu0 0.0
  %377 = vmatpush2.msra.mxu0 0.0
  %378 = vmatprep.subr.mxu0 0.0
  %379 = vmatpush2.msra.mxu0 0.0
  %380 = vmatprep.subr.mxu0 0.0
  %381 = vmatpush2.msra.mxu0 0.0
  %382 = vmatprep.subr.mxu0 0.0
  %383 = vmatpush2.msra.mxu0 0.0
  %384 = vmatprep.subr.mxu0 0.0
  %385 = vmatpush2.msra.mxu0 0.0
  %386 = vmatprep.subr.mxu0 0.0
  %387 = vmatpush2.msra.mxu0 0.0
  %388 = vmatprep.subr.mxu0 0.0
  %389 = vmatpush2.msra.mxu0 0.0
  %390 = vmatprep.subr.mxu0 0.0
  %391 = vmatpush2.msra.mxu0 0.0
  %392 = vmatprep.mubr.f32.mxu0 0.0
  %393 = vmatmul.mubr.f32.gmra.mxu0 %v228
  %v394 = vpop.f32.mrf.mxu0
  %v395 = vadd.f32 0.0, %v394
  %v396 = vpop.f32.mrf.mxu0
  %v397 = vadd.f32 0.0, %v396
  %398 = vmatprep.mubr.f32.mxu0 0.0
  %399 = vmatmul.mubr.f32.gmra.mxu0 %v231
  %v400 = vpop.f32.mrf.mxu0
  %v401 = vadd.f32 0.0, %v400
  %v402 = vpop.f32.mrf.mxu0
  %v403 = vadd.f32 0.0, %v402
  %404 = vmatprep.mubr.f32.mxu0 0.0
  %405 = vmatmul.mubr.f32.gmra.mxu0 %v234
  %v406 = vpop.f32.mrf.mxu0
  %v407 = vadd.f32 0.0, %v406
  %v408 = vpop.f32.mrf.mxu0
  %v409 = vadd.f32 0.0, %v408
  %410 = vmatprep.mubr.f32.mxu0 0.0
  %411 = vmatmul.mubr.f32.gmra.mxu0 %v237
  %v412 = vpop.f32.mrf.mxu0
  %v413 = vadd.f32 0.0, %v412
  %v414 = vpop.f32.mrf.mxu0
  %v415 = vadd.f32 0.0, %v414
  %416 = vdwg.mxu0
  %v417 = vld [vmem:[%s4] sm:$0xff]
  %v418 = vld [vmem:[%s4 + $0x8] sm:$0xff]
  %v419 = vld [vmem:[%s4 + $0x10] sm:$0xff]
  %v420 = vld [vmem:[%s4 + $0x18] sm:$0xff]
  %422 = vset.pattern.permute.xlu0 0
  %423 = vperm.xlu0 %422, %v417
  %v424 = vpop.permute.xlu0 %423
  %427 = vset.pattern.permute.xlu0 0
  %428 = vperm.xlu0 %427, %v418
  %v429 = vpop.permute.xlu0 %428
  %432 = vset.pattern.permute.xlu0 0
  %433 = vperm.xlu0 %432, %v419
  %v434 = vpop.permute.xlu0 %433
  %437 = vset.pattern.permute.xlu0 0
  %438 = vperm.xlu0 %437, %v420
  %v439 = vpop.permute.xlu0 %438
  %v441 = vadd.f32 %v306, %v424
  %v442 = vadd.f32 %v312, %v429
  %v443 = vadd.f32 %v318, %v434
  %v444 = vadd.f32 %v324, %v439
  %v445 = vmul.f32 %v441, 0.5
  %v446 = vmul.f32 %v442, 0.5
  %v447 = vmul.f32 %v443, 0.5
  %v448 = vmul.f32 %v444, 0.5
  %v449 = vtanh.pop %v445
  %v450 = vtanh.pop %v446
  %v451 = vtanh.pop %v447
  %v452 = vtanh.pop %v448
  %v453 = vmul.f32 %v449, 0.5
  %v454 = vmul.f32 %v450, 0.5
  %v455 = vmul.f32 %v451, 0.5
  %v456 = vmul.f32 %v452, 0.5
  %v457 = vadd.f32 %v453, 0.5
  %v458 = vadd.f32 %v454, 0.5
  %v459 = vadd.f32 %v455, 0.5
  %v460 = vadd.f32 %v456, 0.5
  %v461 = vsub.f32 1.0, %v457
  %v462 = vsub.f32 1.0, %v458
  %v463 = vsub.f32 1.0, %v459
  %v464 = vsub.f32 1.0, %v460
  %v465 = vmul.f32 %v457, %v461
  %v466 = vmul.f32 %v458, %v462
  %v467 = vmul.f32 %v459, %v463
  %v468 = vmul.f32 %v460, %v464
  %v469 = vmul.f32 %v457, 2.0
  %v470 = vmul.f32 %v458, 2.0
  %v471 = vmul.f32 %v459, 2.0
  %v472 = vmul.f32 %v460, 2.0
  %v473 = vsub.f32 1.0, %v469
  %v474 = vsub.f32 1.0, %v470
  %v475 = vsub.f32 1.0, %v471
  %v476 = vsub.f32 1.0, %v472
  %v477 = vmul.f32 %v465, %v473
  %v478 = vmul.f32 %v466, %v474
  %v479 = vmul.f32 %v467, %v475
  %v480 = vmul.f32 %v468, %v476
  %481 = vst [vmem:[#allocation2] sm:$0xff] %v457
  %482 = vst [vmem:[#allocation2 + $0x20] sm:$0xff] %v458
  %483 = vst [vmem:[#allocation2 + $0x40] sm:$0xff] %v459
  %484 = vst [vmem:[#allocation2 + $0x60] sm:$0xff] %v460
  %v485 = vmul.f32 %v465, %v308
  %v486 = vmul.f32 %v466, %v314
  %v487 = vmul.f32 %v467, %v320
  %v488 = vmul.f32 %v468, %v326
  %489 = vst [vmem:[#allocation2 + $0x8] sm:$0xff] %v485
  %490 = vst [vmem:[#allocation2 + $0x28] sm:$0xff] %v486
  %491 = vst [vmem:[#allocation2 + $0x48] sm:$0xff] %v487
  %492 = vst [vmem:[#allocation2 + $0x68] sm:$0xff] %v488
  %v493 = vmul.f32 %v465, %v395
  %v494 = vmul.f32 %v466, %v401
  %v495 = vmul.f32 %v467, %v407
  %v496 = vmul.f32 %v468, %v413
  %497 = vst [vmem:[#allocation2 + $0x10] sm:$0xff] %v493
  %498 = vst [vmem:[#allocation2 + $0x30] sm:$0xff] %v494
  %499 = vst [vmem:[#allocation2 + $0x50] sm:$0xff] %v495
  %500 = vst [vmem:[#allocation2 + $0x70] sm:$0xff] %v496
  %v501 = vmul.f32 %v477, %v395
  %v502 = vmul.f32 %v478, %v401
  %v503 = vmul.f32 %v479, %v407
  %v504 = vmul.f32 %v480, %v413
  %v505 = vmul.f32 %v501, %v395
  %v506 = vmul.f32 %v502, %v401
  %v507 = vmul.f32 %v503, %v407
  %v508 = vmul.f32 %v504, %v413
  %v509 = vmul.f32 %v465, %v397
  %v510 = vmul.f32 %v466, %v403
  %v511 = vmul.f32 %v467, %v409
  %v512 = vmul.f32 %v468, %v415
  %v513 = vadd.f32 %v505, %v509
  %v514 = vadd.f32 %v506, %v510
  %v515 = vadd.f32 %v507, %v511
  %v516 = vadd.f32 %v508, %v512
  %517 = vst [vmem:[#allocation2 + $0x18] sm:$0xff] %v513
  %518 = vst [vmem:[#allocation2 + $0x38] sm:$0xff] %v514
  %519 = vst [vmem:[#allocation2 + $0x58] sm:$0xff] %v515
  %520 = vst [vmem:[#allocation2 + $0x78] sm:$0xff] %v516
  %s521 = scalar_lea.vmem %s3, 32
  %v522 = vld [vmem:[%s521] sm:$0xff]
  %v523 = vld [vmem:[%s521 + $0x8] sm:$0xff]
  %v524 = vld [vmem:[%s521 + $0x10] sm:$0xff]
  %v525 = vld [vmem:[%s521 + $0x18] sm:$0xff]
  %v526 = vld [vmem:[#allocation2] sm:$0xff]
  %v527 = vld [vmem:[#allocation2 + $0x8] sm:$0xff]
  %v528 = vld [vmem:[#allocation2 + $0x10] sm:$0xff]
  %v529 = vld [vmem:[#allocation2 + $0x18] sm:$0xff]
  %v530 = vld [vmem:[#allocation2 + $0x20] sm:$0xff]
  %v531 = vld [vmem:[#allocation2 + $0x28] sm:$0xff]
  %v532 = vld [vmem:[#allocation2 + $0x30] sm:$0xff]
  %v533 = vld [vmem:[#allocation2 + $0x38] sm:$0xff]
  %v534 = vld [vmem:[#allocation2 + $0x40] sm:$0xff]
  %v535 = vld [vmem:[#allocation2 + $0x48] sm:$0xff]
  %v536 = vld [vmem:[#allocation2 + $0x50] sm:$0xff]
  %v537 = vld [vmem:[#allocation2 + $0x58] sm:$0xff]
  %v538 = vld [vmem:[#allocation2 + $0x60] sm:$0xff]
  %v539 = vld [vmem:[#allocation2 + $0x68] sm:$0xff]
  %v540 = vld [vmem:[#allocation2 + $0x70] sm:$0xff]
  %v541 = vld [vmem:[#allocation2 + $0x78] sm:$0xff]
  %v543 = vsel %vm226, %v522, 0
  %v546 = vsel %vm226, %v523, 0
  %v549 = vsel %vm226, %v524, 0
  %v552 = vsel %vm226, %v525, 0
  %554 = vmatprep.subr.mxu0 0.0
  %555 = vmatpush1.msra.mxu0 0.0
  %556 = vmatprep.subr.mxu0 0.0
  %557 = vmatpush1.msra.mxu0 0.0
  %558 = vmatprep.subr.mxu0 0.0
  %559 = vmatpush1.msra.mxu0 0.0
  %560 = vmatprep.subr.mxu0 0.0
  %561 = vmatpush1.msra.mxu0 0.0
  %562 = vmatprep.subr.mxu0 0.0
  %563 = vmatpush1.msra.mxu0 0.0
  %564 = vmatprep.subr.mxu0 0.0
  %565 = vmatpush1.msra.mxu0 0.0
  %566 = vmatprep.subr.mxu0 0.0
  %567 = vmatpush1.msra.mxu0 0.0
  %568 = vmatprep.subr.mxu0 0.0
  %569 = vmatpush1.msra.mxu0 0.0
  %570 = vmatprep.subr.mxu0 0.0
  %571 = vmatpush1.msra.mxu0 0.0
  %572 = vmatprep.subr.mxu0 0.0
  %573 = vmatpush1.msra.mxu0 0.0
  %574 = vmatprep.subr.mxu0 0.0
  %575 = vmatpush1.msra.mxu0 0.0
  %576 = vmatprep.subr.mxu0 0.0
  %577 = vmatpush1.msra.mxu0 0.0
  %578 = vmatprep.subr.mxu0 %v539
  %579 = vmatpush1.msra.mxu0 %v538
  %580 = vmatprep.subr.mxu0 %v535
  %581 = vmatpush1.msra.mxu0 %v534
  %582 = vmatprep.subr.mxu0 %v531
  %583 = vmatpush1.msra.mxu0 %v530
  %584 = vmatprep.subr.mxu0 %v527
  %585 = vmatpush1.msra.mxu0 %v526
  %586 = vmatprep.subr.mxu0 0.0
  %587 = vmatpush2.msra.mxu0 0.0
  %588 = vmatprep.subr.mxu0 0.0
  %589 = vmatpush2.msra.mxu0 0.0
  %590 = vmatprep.subr.mxu0 0.0
  %591 = vmatpush2.msra.mxu0 0.0
  %592 = vmatprep.subr.mxu0 0.0
  %593 = vmatpush2.msra.mxu0 0.0
  %594 = vmatprep.subr.mxu0 0.0
  %595 = vmatpush2.msra.mxu0 0.0
  %596 = vmatprep.subr.mxu0 0.0
  %597 = vmatpush2.msra.mxu0 0.0
  %598 = vmatprep.subr.mxu0 0.0
  %599 = vmatpush2.msra.mxu0 0.0
  %600 = vmatprep.subr.mxu0 0.0
  %601 = vmatpush2.msra.mxu0 0.0
  %602 = vmatprep.subr.mxu0 0.0
  %603 = vmatpush2.msra.mxu0 0.0
  %604 = vmatprep.subr.mxu0 0.0
  %605 = vmatpush2.msra.mxu0 0.0
  %606 = vmatprep.subr.mxu0 0.0
  %607 = vmatpush2.msra.mxu0 0.0
  %608 = vmatprep.subr.mxu0 0.0
  %609 = vmatpush2.msra.mxu0 0.0
  %610 = vmatprep.subr.mxu0 0.0
  %611 = vmatpush2.msra.mxu0 0.0
  %612 = vmatprep.subr.mxu0 0.0
  %613 = vmatpush2.msra.mxu0 0.0
  %614 = vmatprep.subr.mxu0 0.0
  %615 = vmatpush2.msra.mxu0 0.0
  %616 = vmatprep.subr.mxu0 0.0
  %617 = vmatpush2.msra.mxu0 0.0
  %618 = vmatprep.mubr.f32.mxu0 0.0
  %619 = vmatmul.mubr.f32.gmra.mxu0 %v543
  %v620 = vpop.f32.mrf.mxu0
  %v621 = vadd.f32 0.0, %v620
  %v622 = vpop.f32.mrf.mxu0
  %v623 = vadd.f32 0.0, %v622
  %624 = vmatprep.mubr.f32.mxu0 0.0
  %625 = vmatmul.mubr.f32.gmra.mxu0 %v546
  %v626 = vpop.f32.mrf.mxu0
  %v627 = vadd.f32 0.0, %v626
  %v628 = vpop.f32.mrf.mxu0
  %v629 = vadd.f32 0.0, %v628
  %630 = vmatprep.mubr.f32.mxu0 0.0
  %631 = vmatmul.mubr.f32.gmra.mxu0 %v549
  %v632 = vpop.f32.mrf.mxu0
  %v633 = vadd.f32 0.0, %v632
  %v634 = vpop.f32.mrf.mxu0
  %v635 = vadd.f32 0.0, %v634
  %636 = vmatprep.mubr.f32.mxu0 0.0
  %637 = vmatmul.mubr.f32.gmra.mxu0 %v552
  %v638 = vpop.f32.mrf.mxu0
  %v639 = vadd.f32 0.0, %v638
  %v640 = vpop.f32.mrf.mxu0
  %v641 = vadd.f32 0.0, %v640
  %642 = vdwg.mxu0
  %643 = vmatprep.subr.mxu0 0.0
  %644 = vmatpush1.msra.mxu0 0.0
  %645 = vmatprep.subr.mxu0 0.0
  %646 = vmatpush1.msra.mxu0 0.0
  %647 = vmatprep.subr.mxu0 0.0
  %648 = vmatpush1.msra.mxu0 0.0
  %649 = vmatprep.subr.mxu0 0.0
  %650 = vmatpush1.msra.mxu0 0.0
  %651 = vmatprep.subr.mxu0 0.0
  %652 = vmatpush1.msra.mxu0 0.0
  %653 = vmatprep.subr.mxu0 0.0
  %654 = vmatpush1.msra.mxu0 0.0
  %655 = vmatprep.subr.mxu0 0.0
  %656 = vmatpush1.msra.mxu0 0.0
  %657 = vmatprep.subr.mxu0 0.0
  %658 = vmatpush1.msra.mxu0 0.0
  %659 = vmatprep.subr.mxu0 0.0
  %660 = vmatpush1.msra.mxu0 0.0
  %661 = vmatprep.subr.mxu0 0.0
  %662 = vmatpush1.msra.mxu0 0.0
  %663 = vmatprep.subr.mxu0 0.0
  %664 = vmatpush1.msra.mxu0 0.0
  %665 = vmatprep.subr.mxu0 0.0
  %666 = vmatpush1.msra.mxu0 0.0
  %667 = vmatprep.subr.mxu0 %v541
  %668 = vmatpush1.msra.mxu0 %v540
  %669 = vmatprep.subr.mxu0 %v537
  %670 = vmatpush1.msra.mxu0 %v536
  %671 = vmatprep.subr.mxu0 %v533
  %672 = vmatpush1.msra.mxu0 %v532
  %673 = vmatprep.subr.mxu0 %v529
  %674 = vmatpush1.msra.mxu0 %v528
  %675 = vmatprep.subr.mxu0 0.0
  %676 = vmatpush2.msra.mxu0 0.0
  %677 = vmatprep.subr.mxu0 0.0
  %678 = vmatpush2.msra.mxu0 0.0
  %679 = vmatprep.subr.mxu0 0.0
  %680 = vmatpush2.msra.mxu0 0.0
  %681 = vmatprep.subr.mxu0 0.0
  %682 = vmatpush2.msra.mxu0 0.0
  %683 = vmatprep.subr.mxu0 0.0
  %684 = vmatpush2.msra.mxu0 0.0
  %685 = vmatprep.subr.mxu0 0.0
  %686 = vmatpush2.msra.mxu0 0.0
  %687 = vmatprep.subr.mxu0 0.0
  %688 = vmatpush2.msra.mxu0 0.0
  %689 = vmatprep.subr.mxu0 0.0
  %690 = vmatpush2.msra.mxu0 0.0
  %691 = vmatprep.subr.mxu0 0.0
  %692 = vmatpush2.msra.mxu0 0.0
  %693 = vmatprep.subr.mxu0 0.0
  %694 = vmatpush2.msra.mxu0 0.0
  %695 = vmatprep.subr.mxu0 0.0
  %696 = vmatpush2.msra.mxu0 0.0
  %697 = vmatprep.subr.mxu0 0.0
  %698 = vmatpush2.msra.mxu0 0.0
  %699 = vmatprep.subr.mxu0 0.0
  %700 = vmatpush2.msra.mxu0 0.0
  %701 = vmatprep.subr.mxu0 0.0
  %702 = vmatpush2.msra.mxu0 0.0
  %703 = vmatprep.subr.mxu0 0.0
  %704 = vmatpush2.msra.mxu0 0.0
  %705 = vmatprep.subr.mxu0 0.0
  %706 = vmatpush2.msra.mxu0 0.0
  %707 = vmatprep.mubr.f32.mxu0 0.0
  %708 = vmatmul.mubr.f32.gmra.mxu0 %v543
  %v709 = vpop.f32.mrf.mxu0
  %v710 = vadd.f32 0.0, %v709
  %v711 = vpop.f32.mrf.mxu0
  %v712 = vadd.f32 0.0, %v711
  %713 = vmatprep.mubr.f32.mxu0 0.0
  %714 = vmatmul.mubr.f32.gmra.mxu0 %v546
  %v715 = vpop.f32.mrf.mxu0
  %v716 = vadd.f32 0.0, %v715
  %v717 = vpop.f32.mrf.mxu0
  %v718 = vadd.f32 0.0, %v717
  %719 = vmatprep.mubr.f32.mxu0 0.0
  %720 = vmatmul.mubr.f32.gmra.mxu0 %v549
  %v721 = vpop.f32.mrf.mxu0
  %v722 = vadd.f32 0.0, %v721
  %v723 = vpop.f32.mrf.mxu0
  %v724 = vadd.f32 0.0, %v723
  %725 = vmatprep.mubr.f32.mxu0 0.0
  %726 = vmatmul.mubr.f32.gmra.mxu0 %v552
  %v727 = vpop.f32.mrf.mxu0
  %v728 = vadd.f32 0.0, %v727
  %v729 = vpop.f32.mrf.mxu0
  %v730 = vadd.f32 0.0, %v729
  %731 = vdwg.mxu0
  %s732 = scalar_lea.vmem %s4, 32
  %v733 = vld [vmem:[%s732] sm:$0xff]
  %v734 = vld [vmem:[%s732 + $0x8] sm:$0xff]
  %v735 = vld [vmem:[%s732 + $0x10] sm:$0xff]
  %v736 = vld [vmem:[%s732 + $0x18] sm:$0xff]
  %738 = vset.pattern.permute.xlu0 0
  %739 = vperm.xlu0 %738, %v733
  %v740 = vpop.permute.xlu0 %739
  %743 = vset.pattern.permute.xlu0 0
  %744 = vperm.xlu0 %743, %v734
  %v745 = vpop.permute.xlu0 %744
  %748 = vset.pattern.permute.xlu0 0
  %749 = vperm.xlu0 %748, %v735
  %v750 = vpop.permute.xlu0 %749
  %753 = vset.pattern.permute.xlu0 0
  %754 = vperm.xlu0 %753, %v736
  %v755 = vpop.permute.xlu0 %754
  %v757 = vadd.f32 %v621, %v740
  %v758 = vadd.f32 %v627, %v745
  %v759 = vadd.f32 %v633, %v750
  %v760 = vadd.f32 %v639, %v755
  %v761 = vmul.f32 %v757, 0.5
  %v762 = vmul.f32 %v758, 0.5
  %v763 = vmul.f32 %v759, 0.5
  %v764 = vmul.f32 %v760, 0.5
  %v765 = vtanh.pop %v761
  %v766 = vtanh.pop %v762
  %v767 = vtanh.pop %v763
  %v768 = vtanh.pop %v764
  %v769 = vmul.f32 %v765, 0.5
  %v770 = vmul.f32 %v766, 0.5
  %v771 = vmul.f32 %v767, 0.5
  %v772 = vmul.f32 %v768, 0.5
  %v773 = vadd.f32 %v769, 0.5
  %v774 = vadd.f32 %v770, 0.5
  %v775 = vadd.f32 %v771, 0.5
  %v776 = vadd.f32 %v772, 0.5
  %v777 = vsub.f32 1.0, %v773
  %v778 = vsub.f32 1.0, %v774
  %v779 = vsub.f32 1.0, %v775
  %v780 = vsub.f32 1.0, %v776
  %v781 = vmul.f32 %v773, %v777
  %v782 = vmul.f32 %v774, %v778
  %v783 = vmul.f32 %v775, %v779
  %v784 = vmul.f32 %v776, %v780
  %v785 = vmul.f32 %v773, 2.0
  %v786 = vmul.f32 %v774, 2.0
  %v787 = vmul.f32 %v775, 2.0
  %v788 = vmul.f32 %v776, 2.0
  %v789 = vsub.f32 1.0, %v785
  %v790 = vsub.f32 1.0, %v786
  %v791 = vsub.f32 1.0, %v787
  %v792 = vsub.f32 1.0, %v788
  %v793 = vmul.f32 %v781, %v789
  %v794 = vmul.f32 %v782, %v790
  %v795 = vmul.f32 %v783, %v791
  %v796 = vmul.f32 %v784, %v792
  %797 = vst [vmem:[#allocation2] sm:$0xff] %v773
  %798 = vst [vmem:[#allocation2 + $0x20] sm:$0xff] %v774
  %799 = vst [vmem:[#allocation2 + $0x40] sm:$0xff] %v775
  %800 = vst [vmem:[#allocation2 + $0x60] sm:$0xff] %v776
  %v801 = vmul.f32 %v781, %v623
  %v802 = vmul.f32 %v782, %v629
  %v803 = vmul.f32 %v783, %v635
  %v804 = vmul.f32 %v784, %v641
  %805 = vst [vmem:[#allocation2 + $0x8] sm:$0xff] %v801
  %806 = vst [vmem:[#allocation2 + $0x28] sm:$0xff] %v802
  %807 = vst [vmem:[#allocation2 + $0x48] sm:$0xff] %v803
  %808 = vst [vmem:[#allocation2 + $0x68] sm:$0xff] %v804
  %v809 = vmul.f32 %v781, %v710
  %v810 = vmul.f32 %v782, %v716
  %v811 = vmul.f32 %v783, %v722
  %v812 = vmul.f32 %v784, %v728
  %813 = vst [vmem:[#allocation2 + $0x10] sm:$0xff] %v809
  %814 = vst [vmem:[#allocation2 + $0x30] sm:$0xff] %v810
  %815 = vst [vmem:[#allocation2 + $0x50] sm:$0xff] %v811
  %816 = vst [vmem:[#allocation2 + $0x70] sm:$0xff] %v812
  %v817 = vmul.f32 %v793, %v710
  %v818 = vmul.f32 %v794, %v716
  %v819 = vmul.f32 %v795, %v722
  %v820 = vmul.f32 %v796, %v728
  %v821 = vmul.f32 %v817, %v710
  %v822 = vmul.f32 %v818, %v716
  %v823 = vmul.f32 %v819, %v722
  %v824 = vmul.f32 %v820, %v728
  %v825 = vmul.f32 %v781, %v712
  %v826 = vmul.f32 %v782, %v718
  %v827 = vmul.f32 %v783, %v724
  %v828 = vmul.f32 %v784, %v730
  %v829 = vadd.f32 %v821, %v825
  %v830 = vadd.f32 %v822, %v826
  %v831 = vadd.f32 %v823, %v827
  %v832 = vadd.f32 %v824, %v828
  %833 = vst [vmem:[#allocation2 + $0x18] sm:$0xff] %v829
  %834 = vst [vmem:[#allocation2 + $0x38] sm:$0xff] %v830
  %835 = vst [vmem:[#allocation2 + $0x58] sm:$0xff] %v831
  %836 = vst [vmem:[#allocation2 + $0x78] sm:$0xff] %v832
  %s837 = scalar_lea.vmem %s3, 64
  %v838 = vld [vmem:[%s837] sm:$0xff]
  %v839 = vld [vmem:[%s837 + $0x8] sm:$0xff]
  %v840 = vld [vmem:[%s837 + $0x10] sm:$0xff]
  %v841 = vld [vmem:[%s837 + $0x18] sm:$0xff]
  %v842 = vld [vmem:[#allocation2] sm:$0xff]
  %v843 = vld [vmem:[#allocation2 + $0x8] sm:$0xff]
  %v844 = vld [vmem:[#allocation2 + $0x10] sm:$0xff]
  %v845 = vld [vmem:[#allocation2 + $0x18] sm:$0xff]
  %v846 = vld [vmem:[#allocation2 + $0x20] sm:$0xff]
  %v847 = vld [vmem:[#allocation2 + $0x28] sm:$0xff]
  %v848 = vld [vmem:[#allocation2 + $0x30] sm:$0xff]
  %v849 = vld [vmem:[#allocation2 + $0x38] sm:$0xff]
  %v850 = vld [vmem:[#allocation2 + $0x40] sm:$0xff]
  %v851 = vld [vmem:[#allocation2 + $0x48] sm:$0xff]
  %v852 = vld [vmem:[#allocation2 + $0x50] sm:$0xff]
  %v853 = vld [vmem:[#allocation2 + $0x58] sm:$0xff]
  %v854 = vld [vmem:[#allocation2 + $0x60] sm:$0xff]
  %v855 = vld [vmem:[#allocation2 + $0x68] sm:$0xff]
  %v856 = vld [vmem:[#allocation2 + $0x70] sm:$0xff]
  %v857 = vld [vmem:[#allocation2 + $0x78] sm:$0xff]
  %v859 = vsel %vm226, %v838, 0
  %v862 = vsel %vm226, %v839, 0
  %v865 = vsel %vm226, %v840, 0
  %v868 = vsel %vm226, %v841, 0
  %870 = vmatprep.subr.mxu0 0.0
  %871 = vmatpush1.msra.mxu0 0.0
  %872 = vmatprep.subr.mxu0 0.0
  %873 = vmatpush1.msra.mxu0 0.0
  %874 = vmatprep.subr.mxu0 0.0
  %875 = vmatpush1.msra.mxu0 0.0
  %876 = vmatprep.subr.mxu0 0.0
  %877 = vmatpush1.msra.mxu0 0.0
  %878 = vmatprep.subr.mxu0 0.0
  %879 = vmatpush1.msra.mxu0 0.0
  %880 = vmatprep.subr.mxu0 0.0
  %881 = vmatpush1.msra.mxu0 0.0
  %882 = vmatprep.subr.mxu0 0.0
  %883 = vmatpush1.msra.mxu0 0.0
  %884 = vmatprep.subr.mxu0 0.0
  %885 = vmatpush1.msra.mxu0 0.0
  %886 = vmatprep.subr.mxu0 0.0
  %887 = vmatpush1.msra.mxu0 0.0
  %888 = vmatprep.subr.mxu0 0.0
  %889 = vmatpush1.msra.mxu0 0.0
  %890 = vmatprep.subr.mxu0 0.0
  %891 = vmatpush1.msra.mxu0 0.0
  %892 = vmatprep.subr.mxu0 0.0
  %893 = vmatpush1.msra.mxu0 0.0
  %894 = vmatprep.subr.mxu0 %v855
  %895 = vmatpush1.msra.mxu0 %v854
  %896 = vmatprep.subr.mxu0 %v851
  %897 = vmatpush1.msra.mxu0 %v850
  %898 = vmatprep.subr.mxu0 %v847
  %899 = vmatpush1.msra.mxu0 %v846
  %900 = vmatprep.subr.mxu0 %v843
  %901 = vmatpush1.msra.mxu0 %v842
  %902 = vmatprep.subr.mxu0 0.0
  %903 = vmatpush2.msra.mxu0 0.0
  %904 = vmatprep.subr.mxu0 0.0
  %905 = vmatpush2.msra.mxu0 0.0
  %906 = vmatprep.subr.mxu0 0.0
  %907 = vmatpush2.msra.mxu0 0.0
  %908 = vmatprep.subr.mxu0 0.0
  %909 = vmatpush2.msra.mxu0 0.0
  %910 = vmatprep.subr.mxu0 0.0
  %911 = vmatpush2.msra.mxu0 0.0
  %912 = vmatprep.subr.mxu0 0.0
  %913 = vmatpush2.msra.mxu0 0.0
  %914 = vmatprep.subr.mxu0 0.0
  %915 = vmatpush2.msra.mxu0 0.0
  %916 = vmatprep.subr.mxu0 0.0
  %917 = vmatpush2.msra.mxu0 0.0
  %918 = vmatprep.subr.mxu0 0.0
  %919 = vmatpush2.msra.mxu0 0.0
  %920 = vmatprep.subr.mxu0 0.0
  %921 = vmatpush2.msra.mxu0 0.0
  %922 = vmatprep.subr.mxu0 0.0
  %923 = vmatpush2.msra.mxu0 0.0
  %924 = vmatprep.subr.mxu0 0.0
  %925 = vmatpush2.msra.mxu0 0.0
  %926 = vmatprep.subr.mxu0 0.0
  %927 = vmatpush2.msra.mxu0 0.0
  %928 = vmatprep.subr.mxu0 0.0
  %929 = vmatpush2.msra.mxu0 0.0
  %930 = vmatprep.subr.mxu0 0.0
  %931 = vmatpush2.msra.mxu0 0.0
  %932 = vmatprep.subr.mxu0 0.0
  %933 = vmatpush2.msra.mxu0 0.0
  %934 = vmatprep.mubr.f32.mxu0 0.0
  %935 = vmatmul.mubr.f32.gmra.mxu0 %v859
  %v936 = vpop.f32.mrf.mxu0
  %v937 = vadd.f32 0.0, %v936
  %v938 = vpop.f32.mrf.mxu0
  %v939 = vadd.f32 0.0, %v938
  %940 = vmatprep.mubr.f32.mxu0 0.0
  %941 = vmatmul.mubr.f32.gmra.mxu0 %v862
  %v942 = vpop.f32.mrf.mxu0
  %v943 = vadd.f32 0.0, %v942
  %v944 = vpop.f32.mrf.mxu0
  %v945 = vadd.f32 0.0, %v944
  %946 = vmatprep.mubr.f32.mxu0 0.0
  %947 = vmatmul.mubr.f32.gmra.mxu0 %v865
  %v948 = vpop.f32.mrf.mxu0
  %v949 = vadd.f32 0.0, %v948
  %v950 = vpop.f32.mrf.mxu0
  %v951 = vadd.f32 0.0, %v950
  %952 = vmatprep.mubr.f32.mxu0 0.0
  %953 = vmatmul.mubr.f32.gmra.mxu0 %v868
  %v954 = vpop.f32.mrf.mxu0
  %v955 = vadd.f32 0.0, %v954
  %v956 = vpop.f32.mrf.mxu0
  %v957 = vadd.f32 0.0, %v956
  %958 = vdwg.mxu0
  %959 = vmatprep.subr.mxu0 0.0
  %960 = vmatpush1.msra.mxu0 0.0
  %961 = vmatprep.subr.mxu0 0.0
  %962 = vmatpush1.msra.mxu0 0.0
  %963 = vmatprep.subr.mxu0 0.0
  %964 = vmatpush1.msra.mxu0 0.0
  %965 = vmatprep.subr.mxu0 0.0
  %966 = vmatpush1.msra.mxu0 0.0
  %967 = vmatprep.subr.mxu0 0.0
  %968 = vmatpush1.msra.mxu0 0.0
  %969 = vmatprep.subr.mxu0 0.0
  %970 = vmatpush1.msra.mxu0 0.0
  %971 = vmatprep.subr.mxu0 0.0
  %972 = vmatpush1.msra.mxu0 0.0
  %973 = vmatprep.subr.mxu0 0.0
  %974 = vmatpush1.msra.mxu0 0.0
  %975 = vmatprep.subr.mxu0 0.0
  %976 = vmatpush1.msra.mxu0 0.0
  %977 = vmatprep.subr.mxu0 0.0
  %978 = vmatpush1.msra.mxu0 0.0
  %979 = vmatprep.subr.mxu0 0.0
  %980 = vmatpush1.msra.mxu0 0.0
  %981 = vmatprep.subr.mxu0 0.0
  %982 = vmatpush1.msra.mxu0 0.0
  %983 = vmatprep.subr.mxu0 %v857
  %984 = vmatpush1.msra.mxu0 %v856
  %985 = vmatprep.subr.mxu0 %v853
  %986 = vmatpush1.msra.mxu0 %v852
  %987 = vmatprep.subr.mxu0 %v849
  %988 = vmatpush1.msra.mxu0 %v848
  %989 = vmatprep.subr.mxu0 %v845
  %990 = vmatpush1.msra.mxu0 %v844
  %991 = vmatprep.subr.mxu0 0.0
  %992 = vmatpush2.msra.mxu0 0.0
  %993 = vmatprep.subr.mxu0 0.0
  %994 = vmatpush2.msra.mxu0 0.0
  %995 = vmatprep.subr.mxu0 0.0
  %996 = vmatpush2.msra.mxu0 0.0
  %997 = vmatprep.subr.mxu0 0.0
  %998 = vmatpush2.msra.mxu0 0.0
  %999 = vmatprep.subr.mxu0 0.0
  %1000 = vmatpush2.msra.mxu0 0.0
  %1001 = vmatprep.subr.mxu0 0.0
  %1002 = vmatpush2.msra.mxu0 0.0
  %1003 = vmatprep.subr.mxu0 0.0
  %1004 = vmatpush2.msra.mxu0 0.0
  %1005 = vmatprep.subr.mxu0 0.0
  %1006 = vmatpush2.msra.mxu0 0.0
  %1007 = vmatprep.subr.mxu0 0.0
  %1008 = vmatpush2.msra.mxu0 0.0
  %1009 = vmatprep.subr.mxu0 0.0
  %1010 = vmatpush2.msra.mxu0 0.0
  %1011 = vmatprep.subr.mxu0 0.0
  %1012 = vmatpush2.msra.mxu0 0.0
  %1013 = vmatprep.subr.mxu0 0.0
  %1014 = vmatpush2.msra.mxu0 0.0
  %1015 = vmatprep.subr.mxu0 0.0
  %1016 = vmatpush2.msra.mxu0 0.0
  %1017 = vmatprep.subr.mxu0 0.0
  %1018 = vmatpush2.msra.mxu0 0.0
  %1019 = vmatprep.subr.mxu0 0.0
  %1020 = vmatpush2.msra.mxu0 0.0
  %1021 = vmatprep.subr.mxu0 0.0
  %1022 = vmatpush2.msra.mxu0 0.0
  %1023 = vmatprep.mubr.f32.mxu0 0.0
  %1024 = vmatmul.mubr.f32.gmra.mxu0 %v859
  %v1025 = vpop.f32.mrf.mxu0
  %v1026 = vadd.f32 0.0, %v1025
  %v1027 = vpop.f32.mrf.mxu0
  %v1028 = vadd.f32 0.0, %v1027
  %1029 = vmatprep.mubr.f32.mxu0 0.0
  %1030 = vmatmul.mubr.f32.gmra.mxu0 %v862
  %v1031 = vpop.f32.mrf.mxu0
  %v1032 = vadd.f32 0.0, %v1031
  %v1033 = vpop.f32.mrf.mxu0
  %v1034 = vadd.f32 0.0, %v1033
  %1035 = vmatprep.mubr.f32.mxu0 0.0
  %1036 = vmatmul.mubr.f32.gmra.mxu0 %v865
  %v1037 = vpop.f32.mrf.mxu0
  %v1038 = vadd.f32 0.0, %v1037
  %v1039 = vpop.f32.mrf.mxu0
  %v1040 = vadd.f32 0.0, %v1039
  %1041 = vmatprep.mubr.f32.mxu0 0.0
  %1042 = vmatmul.mubr.f32.gmra.mxu0 %v868
  %v1043 = vpop.f32.mrf.mxu0
  %v1044 = vadd.f32 0.0, %v1043
  %v1045 = vpop.f32.mrf.mxu0
  %v1046 = vadd.f32 0.0, %v1045
  %1047 = vdwg.mxu0
  %s1048 = scalar_lea.vmem %s4, 64
  %v1049 = vld [vmem:[%s1048] sm:$0xff]
  %v1050 = vld [vmem:[%s1048 + $0x8] sm:$0xff]
  %v1051 = vld [vmem:[%s1048 + $0x10] sm:$0xff]
  %v1052 = vld [vmem:[%s1048 + $0x18] sm:$0xff]
  %1054 = vset.pattern.permute.xlu0 0
  %1055 = vperm.xlu0 %1054, %v1049
  %v1056 = vpop.permute.xlu0 %1055
  %1059 = vset.pattern.permute.xlu0 0
  %1060 = vperm.xlu0 %1059, %v1050
  %v1061 = vpop.permute.xlu0 %1060
  %1064 = vset.pattern.permute.xlu0 0
  %1065 = vperm.xlu0 %1064, %v1051
  %v1066 = vpop.permute.xlu0 %1065
  %1069 = vset.pattern.permute.xlu0 0
  %1070 = vperm.xlu0 %1069, %v1052
  %v1071 = vpop.permute.xlu0 %1070
  %v1073 = vadd.f32 %v937, %v1056
  %v1074 = vadd.f32 %v943, %v1061
  %v1075 = vadd.f32 %v949, %v1066
  %v1076 = vadd.f32 %v955, %v1071
  %v1077 = vmul.f32 %v1073, 0.5
  %v1078 = vmul.f32 %v1074, 0.5
  %v1079 = vmul.f32 %v1075, 0.5
  %v1080 = vmul.f32 %v1076, 0.5
  %v1081 = vtanh.pop %v1077
  %v1082 = vtanh.pop %v1078
  %v1083 = vtanh.pop %v1079
  %v1084 = vtanh.pop %v1080
  %v1085 = vmul.f32 %v1081, 0.5
  %v1086 = vmul.f32 %v1082, 0.5
  %v1087 = vmul.f32 %v1083, 0.5
  %v1088 = vmul.f32 %v1084, 0.5
  %v1089 = vadd.f32 %v1085, 0.5
  %v1090 = vadd.f32 %v1086, 0.5
  %v1091 = vadd.f32 %v1087, 0.5
  %v1092 = vadd.f32 %v1088, 0.5
  %v1093 = vsub.f32 1.0, %v1089
  %v1094 = vsub.f32 1.0, %v1090
  %v1095 = vsub.f32 1.0, %v1091
  %v1096 = vsub.f32 1.0, %v1092
  %v1097 = vmul.f32 %v1089, %v1093
  %v1098 = vmul.f32 %v1090, %v1094
  %v1099 = vmul.f32 %v1091, %v1095
  %v1100 = vmul.f32 %v1092, %v1096
  %v1101 = vmul.f32 %v1089, 2.0
  %v1102 = vmul.f32 %v1090, 2.0
  %v1103 = vmul.f32 %v1091, 2.0
  %v1104 = vmul.f32 %v1092, 2.0
  %v1105 = vsub.f32 1.0, %v1101
  %v1106 = vsub.f32 1.0, %v1102
  %v1107 = vsub.f32 1.0, %v1103
  %v1108 = vsub.f32 1.0, %v1104
  %v1109 = vmul.f32 %v1097, %v1105
  %v1110 = vmul.f32 %v1098, %v1106
  %v1111 = vmul.f32 %v1099, %v1107
  %v1112 = vmul.f32 %v1100, %v1108
  %1113 = vst [vmem:[#allocation2] sm:$0xff] %v1089
  %1114 = vst [vmem:[#allocation2 + $0x20] sm:$0xff] %v1090
  %1115 = vst [vmem:[#allocation2 + $0x40] sm:$0xff] %v1091
  %1116 = vst [vmem:[#allocation2 + $0x60] sm:$0xff] %v1092
  %v1117 = vmul.f32 %v1097, %v939
  %v1118 = vmul.f32 %v1098, %v945
  %v1119 = vmul.f32 %v1099, %v951
  %v1120 = vmul.f32 %v1100, %v957
  %1121 = vst [vmem:[#allocation2 + $0x8] sm:$0xff] %v1117
  %1122 = vst [vmem:[#allocation2 + $0x28] sm:$0xff] %v1118
  %1123 = vst [vmem:[#allocation2 + $0x48] sm:$0xff] %v1119
  %1124 = vst [vmem:[#allocation2 + $0x68] sm:$0xff] %v1120
  %v1125 = vmul.f32 %v1097, %v1026
  %v1126 = vmul.f32 %v1098, %v1032
  %v1127 = vmul.f32 %v1099, %v1038
  %v1128 = vmul.f32 %v1100, %v1044
  %1129 = vst [vmem:[#allocation2 + $0x10] sm:$0xff] %v1125
  %1130 = vst [vmem:[#allocation2 + $0x30] sm:$0xff] %v1126
  %1131 = vst [vmem:[#allocation2 + $0x50] sm:$0xff] %v1127
  %1132 = vst [vmem:[#allocation2 + $0x70] sm:$0xff] %v1128
  %v1133 = vmul.f32 %v1109, %v1026
  %v1134 = vmul.f32 %v1110, %v1032
  %v1135 = vmul.f32 %v1111, %v1038
  %v1136 = vmul.f32 %v1112, %v1044
  %v1137 = vmul.f32 %v1133, %v1026
  %v1138 = vmul.f32 %v1134, %v1032
  %v1139 = vmul.f32 %v1135, %v1038
  %v1140 = vmul.f32 %v1136, %v1044
  %v1141 = vmul.f32 %v1097, %v1028
  %v1142 = vmul.f32 %v1098, %v1034
  %v1143 = vmul.f32 %v1099, %v1040
  %v1144 = vmul.f32 %v1100, %v1046
  %v1145 = vadd.f32 %v1137, %v1141
  %v1146 = vadd.f32 %v1138, %v1142
  %v1147 = vadd.f32 %v1139, %v1143
  %v1148 = vadd.f32 %v1140, %v1144
  %1149 = vst [vmem:[#allocation2 + $0x18] sm:$0xff] %v1145
  %1150 = vst [vmem:[#allocation2 + $0x38] sm:$0xff] %v1146
  %1151 = vst [vmem:[#allocation2 + $0x58] sm:$0xff] %v1147
  %1152 = vst [vmem:[#allocation2 + $0x78] sm:$0xff] %v1148
  %v1153 = vld [vmem:[%s5] sm:$0x1]
  %v1154 = vld [vmem:[#allocation2] sm:$0xff]
  %v1155 = vld [vmem:[#allocation2 + $0x8] sm:$0xff]
  %v1156 = vld [vmem:[#allocation2 + $0x10] sm:$0xff]
  %v1157 = vld [vmem:[#allocation2 + $0x18] sm:$0xff]
  %v1158 = vld [vmem:[#allocation2 + $0x20] sm:$0xff]
  %v1159 = vld [vmem:[#allocation2 + $0x28] sm:$0xff]
  %v1160 = vld [vmem:[#allocation2 + $0x30] sm:$0xff]
  %v1161 = vld [vmem:[#allocation2 + $0x38] sm:$0xff]
  %v1162 = vld [vmem:[#allocation2 + $0x40] sm:$0xff]
  %v1163 = vld [vmem:[#allocation2 + $0x48] sm:$0xff]
  %v1164 = vld [vmem:[#allocation2 + $0x50] sm:$0xff]
  %v1165 = vld [vmem:[#allocation2 + $0x58] sm:$0xff]
  %v1166 = vld [vmem:[#allocation2 + $0x60] sm:$0xff]
  %v1167 = vld [vmem:[#allocation2 + $0x68] sm:$0xff]
  %v1168 = vld [vmem:[#allocation2 + $0x70] sm:$0xff]
  %v1169 = vld [vmem:[#allocation2 + $0x78] sm:$0xff]
  %v1171 = vsel %vm226, %v1153, 0
  %1173 = vmatprep.subr.mxu0 0.0
  %1174 = vmatpush1.msra.mxu0 0.0
  %1175 = vmatprep.subr.mxu0 0.0
  %1176 = vmatpush1.msra.mxu0 0.0
  %1177 = vmatprep.subr.mxu0 0.0
  %1178 = vmatpush1.msra.mxu0 0.0
  %1179 = vmatprep.subr.mxu0 0.0
  %1180 = vmatpush1.msra.mxu0 0.0
  %1181 = vmatprep.subr.mxu0 0.0
  %1182 = vmatpush1.msra.mxu0 0.0
  %1183 = vmatprep.subr.mxu0 0.0
  %1184 = vmatpush1.msra.mxu0 0.0
  %1185 = vmatprep.subr.mxu0 0.0
  %1186 = vmatpush1.msra.mxu0 0.0
  %1187 = vmatprep.subr.mxu0 0.0
  %1188 = vmatpush1.msra.mxu0 0.0
  %1189 = vmatprep.subr.mxu0 0.0
  %1190 = vmatpush1.msra.mxu0 0.0
  %1191 = vmatprep.subr.mxu0 0.0
  %1192 = vmatpush1.msra.mxu0 0.0
  %1193 = vmatprep.subr.mxu0 0.0
  %1194 = vmatpush1.msra.mxu0 0.0
  %1195 = vmatprep.subr.mxu0 0.0
  %1196 = vmatpush1.msra.mxu0 0.0
  %1197 = vmatprep.subr.mxu0 %v1167
  %1198 = vmatpush1.msra.mxu0 %v1166
  %1199 = vmatprep.subr.mxu0 %v1163
  %1200 = vmatpush1.msra.mxu0 %v1162
  %1201 = vmatprep.subr.mxu0 %v1159
  %1202 = vmatpush1.msra.mxu0 %v1158
  %1203 = vmatprep.subr.mxu0 %v1155
  %1204 = vmatpush1.msra.mxu0 %v1154
  %1205 = vmatprep.subr.mxu0 0.0
  %1206 = vmatpush2.msra.mxu0 0.0
  %1207 = vmatprep.subr.mxu0 0.0
  %1208 = vmatpush2.msra.mxu0 0.0
  %1209 = vmatprep.subr.mxu0 0.0
  %1210 = vmatpush2.msra.mxu0 0.0
  %1211 = vmatprep.subr.mxu0 0.0
  %1212 = vmatpush2.msra.mxu0 0.0
  %1213 = vmatprep.subr.mxu0 0.0
  %1214 = vmatpush2.msra.mxu0 0.0
  %1215 = vmatprep.subr.mxu0 0.0
  %1216 = vmatpush2.msra.mxu0 0.0
  %1217 = vmatprep.subr.mxu0 0.0
  %1218 = vmatpush2.msra.mxu0 0.0
  %1219 = vmatprep.subr.mxu0 0.0
  %1220 = vmatpush2.msra.mxu0 0.0
  %1221 = vmatprep.subr.mxu0 0.0
  %1222 = vmatpush2.msra.mxu0 0.0
  %1223 = vmatprep.subr.mxu0 0.0
  %1224 = vmatpush2.msra.mxu0 0.0
  %1225 = vmatprep.subr.mxu0 0.0
  %1226 = vmatpush2.msra.mxu0 0.0
  %1227 = vmatprep.subr.mxu0 0.0
  %1228 = vmatpush2.msra.mxu0 0.0
  %1229 = vmatprep.subr.mxu0 0.0
  %1230 = vmatpush2.msra.mxu0 0.0
  %1231 = vmatprep.subr.mxu0 0.0
  %1232 = vmatpush2.msra.mxu0 0.0
  %1233 = vmatprep.subr.mxu0 0.0
  %1234 = vmatpush2.msra.mxu0 0.0
  %1235 = vmatprep.subr.mxu0 0.0
  %1236 = vmatpush2.msra.mxu0 0.0
  %1237 = vmatprep.mubr.f32.mxu0 0.0
  %1238 = vmatmul.mubr.f32.gmra.mxu0 %v1171
  %v1239 = vpop.f32.mrf.mxu0
  %v1240 = vadd.f32 0.0, %v1239
  %v1241 = vpop.f32.mrf.mxu0
  %v1242 = vadd.f32 0.0, %v1241
  %1243 = vdwg.mxu0
  %1244 = vmatprep.subr.mxu0 0.0
  %1245 = vmatpush1.msra.mxu0 0.0
  %1246 = vmatprep.subr.mxu0 0.0
  %1247 = vmatpush1.msra.mxu0 0.0
  %1248 = vmatprep.subr.mxu0 0.0
  %1249 = vmatpush1.msra.mxu0 0.0
  %1250 = vmatprep.subr.mxu0 0.0
  %1251 = vmatpush1.msra.mxu0 0.0
  %1252 = vmatprep.subr.mxu0 0.0
  %1253 = vmatpush1.msra.mxu0 0.0
  %1254 = vmatprep.subr.mxu0 0.0
  %1255 = vmatpush1.msra.mxu0 0.0
  %1256 = vmatprep.subr.mxu0 0.0
  %1257 = vmatpush1.msra.mxu0 0.0
  %1258 = vmatprep.subr.mxu0 0.0
  %1259 = vmatpush1.msra.mxu0 0.0
  %1260 = vmatprep.subr.mxu0 0.0
  %1261 = vmatpush1.msra.mxu0 0.0
  %1262 = vmatprep.subr.mxu0 0.0
  %1263 = vmatpush1.msra.mxu0 0.0
  %1264 = vmatprep.subr.mxu0 0.0
  %1265 = vmatpush1.msra.mxu0 0.0
  %1266 = vmatprep.subr.mxu0 0.0
  %1267 = vmatpush1.msra.mxu0 0.0
  %1268 = vmatprep.subr.mxu0 %v1169
  %1269 = vmatpush1.msra.mxu0 %v1168
  %1270 = vmatprep.subr.mxu0 %v1165
  %1271 = vmatpush1.msra.mxu0 %v1164
  %1272 = vmatprep.subr.mxu0 %v1161
  %1273 = vmatpush1.msra.mxu0 %v1160
  %1274 = vmatprep.subr.mxu0 %v1157
  %1275 = vmatpush1.msra.mxu0 %v1156
  %1276 = vmatprep.subr.mxu0 0.0
  %1277 = vmatpush2.msra.mxu0 0.0
  %1278 = vmatprep.subr.mxu0 0.0
  %1279 = vmatpush2.msra.mxu0 0.0
  %1280 = vmatprep.subr.mxu0 0.0
  %1281 = vmatpush2.msra.mxu0 0.0
  %1282 = vmatprep.subr.mxu0 0.0
  %1283 = vmatpush2.msra.mxu0 0.0
  %1284 = vmatprep.subr.mxu0 0.0
  %1285 = vmatpush2.msra.mxu0 0.0
  %1286 = vmatprep.subr.mxu0 0.0
  %1287 = vmatpush2.msra.mxu0 0.0
  %1288 = vmatprep.subr.mxu0 0.0
  %1289 = vmatpush2.msra.mxu0 0.0
  %1290 = vmatprep.subr.mxu0 0.0
  %1291 = vmatpush2.msra.mxu0 0.0
  %1292 = vmatprep.subr.mxu0 0.0
  %1293 = vmatpush2.msra.mxu0 0.0
  %1294 = vmatprep.subr.mxu0 0.0
  %1295 = vmatpush2.msra.mxu0 0.0
  %1296 = vmatprep.subr.mxu0 0.0
  %1297 = vmatpush2.msra.mxu0 0.0
  %1298 = vmatprep.subr.mxu0 0.0
  %1299 = vmatpush2.msra.mxu0 0.0
  %1300 = vmatprep.subr.mxu0 0.0
  %1301 = vmatpush2.msra.mxu0 0.0
  %1302 = vmatprep.subr.mxu0 0.0
  %1303 = vmatpush2.msra.mxu0 0.0
  %1304 = vmatprep.subr.mxu0 0.0
  %1305 = vmatpush2.msra.mxu0 0.0
  %1306 = vmatprep.subr.mxu0 0.0
  %1307 = vmatpush2.msra.mxu0 0.0
  %1308 = vmatprep.mubr.f32.mxu0 0.0
  %1309 = vmatmul.mubr.f32.gmra.mxu0 %v1171
  %v1310 = vpop.f32.mrf.mxu0
  %v1311 = vadd.f32 0.0, %v1310
  %v1312 = vpop.f32.mrf.mxu0
  %v1313 = vadd.f32 0.0, %v1312
  %1314 = vdwg.mxu0
  %v1315 = vld [vmem:[#allocation3] sm:$0x1]
  %1317 = vset.pattern.permute.xlu0 0
  %1318 = vperm.xlu0 %1317, %v1315
  %v1319 = vpop.permute.xlu0 %1318
  %v1321 = vlaneseq
  %v1322 = vshrl.u32 %v1321, 7
  %v1323 = vsub.s32 0, %v1322
  %v1324 = vrot.slane %v1319, %v1323
  %v1325 = vadd.f32 %v1240, %v1324
  %v1326 = vmul.f32 %v1313, 0.0001
  %v1327 = vsub.f32 %v1242, %v1326
  %v1328 = vmul.f32 %v1325, 5.0
  %v1329 = vmul.f32 %v1328, %v1325
  %v1330 = vmul.f32 %v1329, %v1325
  %v1331 = vadd.f32 %v1327, %v1330
  %v1332 = vsub.f32 %v1331, %v1328
  %1333 = vst [vmem:[%s7] sm:$0x1] %v1325
  %1334 = vst [vmem:[%s7 + $0x1] sm:$0x1] %v1242
  %1335 = vst [vmem:[%s7 + $0x2] sm:$0x1] %v1311
  %1336 = vst [vmem:[%s7 + $0x3] sm:$0x1] %v1313
  %1337 = vst [vmem:[%s7 + $0x4] sm:$0x1] %v1332
  // Predicated region
  $region30: #{pinn_ac_forward.1} parent=0 // pred_check
    _
  $region31: #{pinn_ac_forward.1} parent=0 // pred_check_branch
    %1339 = sbr.rel (0) target = $region33
  $region32: #{pinn_ac_forward.1} parent=0 // pred_region
    _
  $region33: #{pinn_ac_forward.1} parent=0 // pred_fallthru
    _
  // Predicated region
  $region34: #{pinn_ac_forward.1} parent=0 // pred_check
    _
  $region35: #{pinn_ac_forward.1} parent=0 // pred_check_branch
    %1341 = sbr.rel (0) target = $region37
  $region36: #{pinn_ac_forward.1} parent=0 // pred_region
    _
  $region37: #{pinn_ac_forward.1} parent=0 // pred_fallthru
    _

</llo_original>
